<compile_context>
chip_gen: v5e
topology: v5e:2x2
jax: 0.10.0
libtpu: 0.0.40
codegen_flags: <defaults>
</compile_context>

<pallas_src>
import jax
import jax.numpy as jnp
from jax import lax
from jax.experimental import pallas as pl
from jax.experimental.pallas import tpu as pltpu

LATENT_DIM = 12
HIDDEN = 12

HP = 16                # padded hidden size
LP = 16                # padded latent size
GP = 4 * HP            # 64 gate rows (order i, f, g, o)

# Row offsets inside the packed parameter slab (all 8-aligned).
OFF_WIHF = 0
OFF_BF = OFF_WIHF + GP            # 64
OFF_WIHB = OFF_BF + GP            # 128
OFF_BB = OFF_WIHB + GP            # 192
OFF_BEMB = OFF_BB + GP            # 256
OFF_BHEAD = OFF_BEMB + LP         # 272
OFF_WHH = OFF_BHEAD + 2 * LP      # 304
OFF_WHEAD = OFF_WHH + GP          # 368
OFF_WEMB = OFF_WHEAD + 2 * LP     # 400
P_ROWS = OFF_WEMB + LP            # 416


def _round_up(n, m):
    return -(-n // m) * m


def _sigmoid(x):
    return 1.0 / (1.0 + jnp.exp(-x))


def make_encoder_kernel(T):
    """Build the kernel for a fixed (static) sequence length T."""

    def kernel(x_ref, eps_ref, p_ref, out_ref):
        B = x_ref.shape[1]

        # ---- unpack packed parameter slab (static, 8-aligned slices) ----
        # Pre-broadcast (lane-dense) vectors:
        w_ih_f = p_ref[OFF_WIHF:OFF_WIHF + GP, :]            # (64, B)
        b_f = p_ref[OFF_BF:OFF_BF + GP, :]                   # (64, B)
        w_ih_b = p_ref[OFF_WIHB:OFF_WIHB + GP, :]            # (64, B)
        b_b = p_ref[OFF_BB:OFF_BB + GP, :]                   # (64, B)
        b_emb = p_ref[OFF_BEMB:OFF_BEMB + LP, :]             # (16, B)
        b_head = p_ref[OFF_BHEAD:OFF_BHEAD + 2 * LP, :]      # (32, B)
        # Small matrices (lanes 0..15 / 0..31 of the slab):
        w_hh = p_ref[OFF_WHH:OFF_WHH + GP, 0:HP]             # (64, 16)
        w_head = p_ref[OFF_WHEAD:OFF_WHEAD + 2 * LP, 0:LP]   # (32, 16)
        w_emb = p_ref[OFF_WEMB:OFF_WEMB + LP, 0:2 * HP]      # (16, 32)

        eps = eps_ref[...]                                   # (16, B)

        def input_gates(x_row, w_ih, b):
            # x_row: (1, B); params already lane-broadcast -> pure VPU math.
            return w_ih * x_row + b                          # (64, B)

        def gate_step(gates, c):
            i = _sigmoid(gates[0 * HP:1 * HP, :])
            f = _sigmoid(gates[1 * HP:2 * HP, :])
            g = jnp.tanh(gates[2 * HP:3 * HP, :])
            o = _sigmoid(gates[3 * HP:4 * HP, :])
            c_new = f * c + i * g
            h_new = o * jnp.tanh(c_new)
            return h_new, c_new

        c0 = jnp.zeros((HP, B), jnp.float32)

        if T <= 64:
            # Fully unrolled; gx computed in-loop so only one gate value is
            # live at a time (no vreg spills). Step 0 has no w_hh term (h0=0).
            h, c = gate_step(input_gates(x_ref[0:1, :], w_ih_f, b_f), c0)
            for t in range(1, T):
                gates = input_gates(x_ref[t:t + 1, :], w_ih_f, b_f) + jnp.dot(
                    w_hh, h, preferred_element_type=jnp.float32)
                h, c = gate_step(gates, c)
        else:
            # Large T: modestly-unrolled fori_loop caps code size / pressure.
            def body(t, carry):
                h, c = carry
                x_row = x_ref[pl.ds(t, 1), :]
                gates = input_gates(x_row, w_ih_f, b_f) + jnp.dot(
                    w_hh, h, preferred_element_type=jnp.float32)
                return gate_step(gates, c)

            h, c = lax.fori_loop(0, T, body,
                                 (jnp.zeros((HP, B), jnp.float32), c0),
                                 unroll=8)
        h_fw = h                                             # (16, B)

        # ---- backward direction: bi-LSTM output at position T-1 is the first
        # step of the reverse pass from zero state (W_hh_b term vanishes);
        # this matches torch's output[:, -1, hidden:].
        gb = input_gates(x_ref[T - 1:T, :], w_ih_b, b_b)     # (64, B)
        i_b = _sigmoid(gb[0 * HP:1 * HP, :])
        g_b = jnp.tanh(gb[2 * HP:3 * HP, :])
        o_b = _sigmoid(gb[3 * HP:4 * HP, :])
        h_bw = o_b * jnp.tanh(i_b * g_b)                     # (16, B)

        # ---- embedding Linear(24 -> latent) as one fused dot + ReLU ----
        h_cat = jnp.concatenate([h_fw, h_bw], axis=0)        # (32, B)
        emb = jnp.dot(w_emb, h_cat, preferred_element_type=jnp.float32) + b_emb
        emb = jnp.maximum(emb, 0.0)

        # ---- stacked mn/sd heads (single dot) + reparameterization ----
        heads = jnp.dot(w_head, emb, preferred_element_type=jnp.float32) + b_head
        mn = heads[0:LP, :]
        sd = heads[LP:2 * LP, :]
        out = eps * jnp.exp(sd * 0.5) + mn

        out_ref[0 * LP:1 * LP, :] = out
        out_ref[1 * LP:2 * LP, :] = mn
        out_ref[2 * LP:3 * LP, :] = sd

    return kernel


def init_params(key, latent_dim=LATENT_DIM, hidden=HIDDEN):
    """Deterministic PyTorch-style uniform init for all module parameters."""
    ks = list(jax.random.split(key, 20))

    def u(k, shape, fan_in):
        bound = 1.0 / (fan_in ** 0.5)
        return jax.random.uniform(k, shape, jnp.float32, -bound, bound)

    p = {}
    # nn.LSTM(1, 12, bidirectional=True)
    p["w_ih_f"] = u(ks[0], (4 * hidden, 1), hidden)
    p["w_hh_f"] = u(ks[1], (4 * hidden, hidden), hidden)
    p["b_ih_f"] = u(ks[2], (4 * hidden,), hidden)
    p["b_hh_f"] = u(ks[3], (4 * hidden,), hidden)
    p["w_ih_b"] = u(ks[4], (4 * hidden, 1), hidden)
    p["w_hh_b"] = u(ks[5], (4 * hidden, hidden), hidden)  # unused: h0 == 0 at the reverse first step
    p["b_ih_b"] = u(ks[6], (4 * hidden,), hidden)
    p["b_hh_b"] = u(ks[7], (4 * hidden,), hidden)
    # nn.Linear(24, latent)
    p["w_emb"] = u(ks[8], (latent_dim, 2 * hidden), 2 * hidden)
    p["b_emb"] = u(ks[9], (latent_dim,), 2 * hidden)
    # nn.Linear(latent, latent) x2
    p["w_mn"] = u(ks[10], (latent_dim, latent_dim), latent_dim)
    p["b_mn"] = u(ks[11], (latent_dim,), latent_dim)
    p["w_sd"] = u(ks[12], (latent_dim, latent_dim), latent_dim)
    p["b_sd"] = u(ks[13], (latent_dim,), latent_dim)
    return p


def _choose_block_b(b_pad, block_b=None):
    """Lane-block size: >=2 blocks when possible (v7x megacore), cap at 512."""
    if block_b is not None:
        assert block_b % 128 == 0 and b_pad % block_b == 0
        return block_b
    if b_pad <= 128:
        return b_pad
    for cand in (512, 384, 256, 128):
        if b_pad % cand == 0 and b_pad // cand >= 2:
            return cand
    return 128


def _pack_params(params, block_b):
    """Pack all parameters into one lane-dense (P_ROWS, block_b) f32 slab."""
    H, L = HIDDEN, LATENT_DIM

    def pad_gate_vec(v):                      # (4H,) -> (GP,), per-gate zero-pad
        v = v.reshape(4, H)
        v = jnp.pad(v, ((0, 0), (0, HP - H)))
        return v.reshape(GP)

    def pad_gate_mat(w):                      # (4H, H) -> (GP, HP)
        w = w.reshape(4, H, H)
        w = jnp.pad(w, ((0, 0), (0, HP - H), (0, HP - H)))
        return w.reshape(GP, HP)

    def bcast(v):                             # (N,) -> (N, block_b), lane-broadcast
        return jnp.broadcast_to(v[:, None], (v.shape[0], block_b))

    def lane_pad(m):                          # (N, K) -> (N, block_b), zero lanes
        return jnp.pad(m, ((0, 0), (0, block_b - m.shape[1])))

    w_ih_f = bcast(pad_gate_vec(params["w_ih_f"].reshape(-1)))
    b_f = bcast(pad_gate_vec(params["b_ih_f"] + params["b_hh_f"]))
    w_ih_b = bcast(pad_gate_vec(params["w_ih_b"].reshape(-1)))
    b_b = bcast(pad_gate_vec(params["b_ih_b"] + params["b_hh_b"]))
    b_emb = bcast(jnp.pad(params["b_emb"], (0, LP - L)))
    b_head = bcast(jnp.concatenate([jnp.pad(params["b_mn"], (0, LP - L)),
                                    jnp.pad(params["b_sd"], (0, LP - L))]))

    w_hh = lane_pad(pad_gate_mat(params["w_hh_f"]))
    w_head = lane_pad(jnp.concatenate(
        [jnp.pad(params["w_mn"], ((0, LP - L), (0, LP - L))),
         jnp.pad(params["w_sd"], ((0, LP - L), (0, LP - L)))], axis=0))
    w_emb_f = jnp.pad(params["w_emb"][:, :H], ((0, LP - L), (0, HP - H)))
    w_emb_b = jnp.pad(params["w_emb"][:, H:], ((0, LP - L), (0, HP - H)))
    w_emb = lane_pad(jnp.concatenate([w_emb_f, w_emb_b], axis=1))

    slab = jnp.concatenate(
        [w_ih_f, b_f, w_ih_b, b_b, b_emb, b_head, w_hh, w_head, w_emb], axis=0)
    assert slab.shape == (P_ROWS, block_b)
    return slab.astype(jnp.float32)


def encoder_forward(params, x, eps, *, block_b=None):
    """x: (B, T, 1) f32, eps: (B, latent) f32 -> (out, mn, sd), each (B, latent)."""
    B, T, _ = x.shape
    L = LATENT_DIM
    T_pad = _round_up(max(T, 8), 8)
    B_pad = _round_up(B, 128)
    BLOCK_B = _choose_block_b(B_pad, block_b)
    nb = B_pad // BLOCK_B

    # Feature-major data: x time-major (T_pad, B_pad); eps kept separate.
    x_tb = jnp.transpose(x[:, :, 0], (1, 0)).astype(jnp.float32)
    x_tb = jnp.pad(x_tb, ((0, T_pad - T), (0, B_pad - B)))
    eps_t = jnp.pad(eps.T.astype(jnp.float32), ((0, LP - L), (0, B_pad - B)))

    p_slab = _pack_params(params, BLOCK_B)

    # VMEM budget: double-buffered x / eps / out blocks + the parameter slab.
    vmem_est = 4 * BLOCK_B * (2 * T_pad + 2 * LP + 2 * 3 * LP + 2 * P_ROWS)
    compiler_kwargs = dict(dimension_semantics=("parallel",))
    if vmem_est > 8 * 1024 * 1024:   # stay under v5e's 16 MiB scoped default
        compiler_kwargs["vmem_limit_bytes"] = min(2 * vmem_est, 48 * 1024 * 1024)

    out_stack = pl.pallas_call(
        make_encoder_kernel(T),
        out_shape=jax.ShapeDtypeStruct((3 * LP, B_pad), jnp.float32),
        grid=(nb,),
        in_specs=[
            pl.BlockSpec((T_pad, BLOCK_B), lambda i: (0, i)),    # x
            pl.BlockSpec((LP, BLOCK_B), lambda i: (0, i)),       # eps
            pl.BlockSpec((P_ROWS, BLOCK_B), lambda i: (0, 0)),   # params (fetched once)
        ],
        out_specs=pl.BlockSpec((3 * LP, BLOCK_B), lambda i: (0, i)),
        compiler_params=pltpu.CompilerParams(**compiler_kwargs),
    )(x_tb, eps_t, p_slab)

    out = out_stack[0 * LP:0 * LP + L, :B].T
    mn = out_stack[1 * LP:1 * LP + L, :B].T
    sd = out_stack[2 * LP:2 * LP + L, :B].T
    return out, mn, sd


def encoder_reference(params, x, eps):
    """Pure-JAX reference mirroring the PyTorch module (f32)."""
    H, L = HIDDEN, LATENT_DIM
    B, T, _ = x.shape

    def run_dir(w_ih, w_hh, b, xs):           # xs: (T, B, 1)
        def step(carry, x_t):
            h, c = carry
            z = x_t @ w_ih.T + h @ w_hh.T + b
            i = _sigmoid(z[:, 0 * H:1 * H])
            f = _sigmoid(z[:, 1 * H:2 * H])
            g = jnp.tanh(z[:, 2 * H:3 * H])
            o = _sigmoid(z[:, 3 * H:4 * H])
            c = f * c + i * g
            h = o * jnp.tanh(c)
            return (h, c), h

        init = (jnp.zeros((B, H), jnp.float32), jnp.zeros((B, H), jnp.float32))
        _, hs = lax.scan(step, init, xs)
        return hs                              # (T, B, H)

    xs = jnp.transpose(x, (1, 0, 2)).astype(jnp.float32)
    hs_f = run_dir(params["w_ih_f"], params["w_hh_f"],
                   params["b_ih_f"] + params["b_hh_f"], xs)
    hs_b = run_dir(params["w_ih_b"], params["w_hh_b"],
                   params["b_ih_b"] + params["b_hh_b"], xs[::-1])
    last = jnp.concatenate([hs_f[-1], hs_b[0]], axis=-1)     # output[:, -1, :]
    emb = jnp.maximum(last @ params["w_emb"].T + params["b_emb"], 0.0)
    mn = emb @ params["w_mn"].T + params["b_mn"]
    sd = emb @ params["w_sd"].T + params["b_sd"]
    out = eps * jnp.exp(0.5 * sd) + mn
    return out, mn, sd


if __name__ == "__main__":
    key = jax.random.PRNGKey(0)
    k_param, k_x, k_eps = jax.random.split(key, 3)

    B, T = 2, 8
    params = init_params(k_param)
    x = jax.random.normal(k_x, (B, T, 1), dtype=jnp.float32)
    # torch.normal(0, 1, size) equivalent (randomness supplied host-side, deterministically)
    eps = jax.random.normal(k_eps, (B, LATENT_DIM), dtype=jnp.float32)

    out, mn, sd = jax.jit(encoder_forward)(params, x, eps)
    jax.block_until_ready((out, mn, sd))

    ref_out, ref_mn, ref_sd = encoder_reference(params, x, eps)
    assert out.shape == (B, LATENT_DIM) and mn.shape == (B, LATENT_DIM) and sd.shape == (B, LATENT_DIM)
    for got, ref in ((out, ref_out), (mn, ref_mn), (sd, ref_sd)):
        assert jnp.all(jnp.isfinite(got))
        assert jnp.allclose(got, ref, rtol=1e-4, atol=1e-5), float(jnp.max(jnp.abs(got - ref)))
    print("KERNEL_OK")
</pallas_src>

<mosaic_0001>
module attributes {stable_mosaic.version = 11 : i64} {
  func.func @kernel(%arg0: i32, %arg1: memref<8x128xf32, #tpu.memory_space<vmem>>, %arg2: memref<16x128xf32, #tpu.memory_space<vmem>>, %arg3: memref<416x128xf32, #tpu.memory_space<vmem>>, %arg4: memref<48x128xf32, #tpu.memory_space<vmem>>) attributes {dimension_semantics = [#tpu.dimension_semantics<parallel>], iteration_bounds = array<i64: 1>, scalar_prefetch = 0 : i64, scratch_operands = 0 : i64, tpu.core_type = #tpu.core_type<tc>, window_params = [{transform_indices = @transform_0, window_bounds = array<i64: 8, 128>}, {transform_indices = @transform_1, window_bounds = array<i64: 16, 128>}, {pipeline_mode = #tpu.pipeline_mode<synchronous>, transform_indices = @transform_2, window_bounds = array<i64: 416, 128>}, {transform_indices = @transform_3, window_bounds = array<i64: 48, 128>}]} {
    %c0 = arith.constant 0 : index
    %c0_0 = arith.constant 0 : index
    %0 = vector.load %arg3[%c0, %c0_0] : memref<416x128xf32, #tpu.memory_space<vmem>>, vector<64x128xf32>
    %c64 = arith.constant 64 : index
    %c0_1 = arith.constant 0 : index
    %1 = vector.load %arg3[%c64, %c0_1] : memref<416x128xf32, #tpu.memory_space<vmem>>, vector<64x128xf32>
    %c128 = arith.constant 128 : index
    %c0_2 = arith.constant 0 : index
    %2 = vector.load %arg3[%c128, %c0_2] : memref<416x128xf32, #tpu.memory_space<vmem>>, vector<64x128xf32>
    %c192 = arith.constant 192 : index
    %c0_3 = arith.constant 0 : index
    %3 = vector.load %arg3[%c192, %c0_3] : memref<416x128xf32, #tpu.memory_space<vmem>>, vector<64x128xf32>
    %c256 = arith.constant 256 : index
    %c0_4 = arith.constant 0 : index
    %4 = vector.load %arg3[%c256, %c0_4] : memref<416x128xf32, #tpu.memory_space<vmem>>, vector<16x128xf32>
    %c272 = arith.constant 272 : index
    %c0_5 = arith.constant 0 : index
    %5 = vector.load %arg3[%c272, %c0_5] : memref<416x128xf32, #tpu.memory_space<vmem>>, vector<32x128xf32>
    %c304 = arith.constant 304 : index
    %c0_6 = arith.constant 0 : index
    %6 = vector.load %arg3[%c304, %c0_6] : memref<416x128xf32, #tpu.memory_space<vmem>>, vector<64x16xf32>
    %c368 = arith.constant 368 : index
    %c0_7 = arith.constant 0 : index
    %7 = vector.load %arg3[%c368, %c0_7] : memref<416x128xf32, #tpu.memory_space<vmem>>, vector<32x16xf32>
    %c400 = arith.constant 400 : index
    %c0_8 = arith.constant 0 : index
    %8 = vector.load %arg3[%c400, %c0_8] : memref<416x128xf32, #tpu.memory_space<vmem>>, vector<16x32xf32>
    %c0_9 = arith.constant 0 : index
    %c0_10 = arith.constant 0 : index
    %9 = vector.load %arg2[%c0_9, %c0_10] : memref<16x128xf32, #tpu.memory_space<vmem>>, vector<16x128xf32>
    %cst = arith.constant 0.000000e+00 : f32
    %10 = vector.broadcast %cst : f32 to vector<16x128xf32>
    %c0_11 = arith.constant 0 : index
    %c0_12 = arith.constant 0 : index
    %11 = vector.load %arg1[%c0_11, %c0_12] : memref<8x128xf32, #tpu.memory_space<vmem>>, vector<1x128xf32>
    %12 = vector.broadcast %11 : vector<1x128xf32> to vector<64x128xf32>
    %13 = arith.mulf %0, %12 : vector<64x128xf32>
    %14 = arith.addf %13, %1 : vector<64x128xf32>
    %15 = vector.extract_strided_slice %14 {offsets = [0, 0], sizes = [16, 128], strides = [1, 1]} : vector<64x128xf32> to vector<16x128xf32>
    %cst_13 = arith.constant 0.000000e+00 : f32
    %16 = vector.broadcast %cst_13 : f32 to vector<16x128xf32>
    %17 = arith.subf %16, %15 : vector<16x128xf32>
    %18 = math.exp %17 : vector<16x128xf32>
    %cst_14 = arith.constant 1.000000e+00 : f32
    %19 = vector.broadcast %cst_14 : f32 to vector<16x128xf32>
    %20 = arith.addf %19, %18 : vector<16x128xf32>
    %cst_15 = arith.constant 1.000000e+00 : f32
    %21 = vector.broadcast %cst_15 : f32 to vector<16x128xf32>
    %22 = arith.divf %21, %20 : vector<16x128xf32>
    %23 = vector.extract_strided_slice %14 {offsets = [16, 0], sizes = [16, 128], strides = [1, 1]} : vector<64x128xf32> to vector<16x128xf32>
    %cst_16 = arith.constant 0.000000e+00 : f32
    %24 = vector.broadcast %cst_16 : f32 to vector<16x128xf32>
    %25 = arith.subf %24, %23 : vector<16x128xf32>
    %26 = math.exp %25 : vector<16x128xf32>
    %cst_17 = arith.constant 1.000000e+00 : f32
    %27 = vector.broadcast %cst_17 : f32 to vector<16x128xf32>
    %28 = arith.addf %27, %26 : vector<16x128xf32>
    %cst_18 = arith.constant 1.000000e+00 : f32
    %29 = vector.broadcast %cst_18 : f32 to vector<16x128xf32>
    %30 = arith.divf %29, %28 : vector<16x128xf32>
    %31 = vector.extract_strided_slice %14 {offsets = [32, 0], sizes = [16, 128], strides = [1, 1]} : vector<64x128xf32> to vector<16x128xf32>
    %32 = math.tanh %31 : vector<16x128xf32>
    %33 = vector.extract_strided_slice %14 {offsets = [48, 0], sizes = [16, 128], strides = [1, 1]} : vector<64x128xf32> to vector<16x128xf32>
    %cst_19 = arith.constant 0.000000e+00 : f32
    %34 = vector.broadcast %cst_19 : f32 to vector<16x128xf32>
    %35 = arith.subf %34, %33 : vector<16x128xf32>
    %36 = math.exp %35 : vector<16x128xf32>
    %cst_20 = arith.constant 1.000000e+00 : f32
    %37 = vector.broadcast %cst_20 : f32 to vector<16x128xf32>
    %38 = arith.addf %37, %36 : vector<16x128xf32>
    %cst_21 = arith.constant 1.000000e+00 : f32
    %39 = vector.broadcast %cst_21 : f32 to vector<16x128xf32>
    %40 = arith.divf %39, %38 : vector<16x128xf32>
    %41 = arith.mulf %30, %10 : vector<16x128xf32>
    %42 = arith.mulf %22, %32 : vector<16x128xf32>
    %43 = arith.addf %41, %42 : vector<16x128xf32>
    %44 = math.tanh %43 : vector<16x128xf32>
    %45 = arith.mulf %40, %44 : vector<16x128xf32>
    %c1 = arith.constant 1 : index
    %c0_22 = arith.constant 0 : index
    %46 = vector.load %arg1[%c1, %c0_22] : memref<8x128xf32, #tpu.memory_space<vmem>>, vector<1x128xf32>
    %47 = vector.broadcast %46 : vector<1x128xf32> to vector<64x128xf32>
    %48 = arith.mulf %0, %47 : vector<64x128xf32>
    %49 = arith.addf %48, %1 : vector<64x128xf32>
    %cst_23 = arith.constant dense<0.000000e+00> : vector<64x128xf32>
    %50 = tpu.matmul %6, %45, %cst_23 {dimension_numbers = #tpu.dot_dimension_numbers<[1], [0], [0], [1], [0, 0, 1, 1], [], []>} : vector<64x16xf32>, vector<16x128xf32>, vector<64x128xf32> -> vector<64x128xf32>
    %51 = arith.addf %49, %50 : vector<64x128xf32>
    %52 = vector.extract_strided_slice %51 {offsets = [0, 0], sizes = [16, 128], strides = [1, 1]} : vector<64x128xf32> to vector<16x128xf32>
    %cst_24 = arith.constant 0.000000e+00 : f32
    %53 = vector.broadcast %cst_24 : f32 to vector<16x128xf32>
    %54 = arith.subf %53, %52 : vector<16x128xf32>
    %55 = math.exp %54 : vector<16x128xf32>
    %cst_25 = arith.constant 1.000000e+00 : f32
    %56 = vector.broadcast %cst_25 : f32 to vector<16x128xf32>
    %57 = arith.addf %56, %55 : vector<16x128xf32>
    %cst_26 = arith.constant 1.000000e+00 : f32
    %58 = vector.broadcast %cst_26 : f32 to vector<16x128xf32>
    %59 = arith.divf %58, %57 : vector<16x128xf32>
    %60 = vector.extract_strided_slice %51 {offsets = [16, 0], sizes = [16, 128], strides = [1, 1]} : vector<64x128xf32> to vector<16x128xf32>
    %cst_27 = arith.constant 0.000000e+00 : f32
    %61 = vector.broadcast %cst_27 : f32 to vector<16x128xf32>
    %62 = arith.subf %61, %60 : vector<16x128xf32>
    %63 = math.exp %62 : vector<16x128xf32>
    %cst_28 = arith.constant 1.000000e+00 : f32
    %64 = vector.broadcast %cst_28 : f32 to vector<16x128xf32>
    %65 = arith.addf %64, %63 : vector<16x128xf32>
    %cst_29 = arith.constant 1.000000e+00 : f32
    %66 = vector.broadcast %cst_29 : f32 to vector<16x128xf32>
    %67 = arith.divf %66, %65 : vector<16x128xf32>
    %68 = vector.extract_strided_slice %51 {offsets = [32, 0], sizes = [16, 128], strides = [1, 1]} : vector<64x128xf32> to vector<16x128xf32>
    %69 = math.tanh %68 : vector<16x128xf32>
    %70 = vector.extract_strided_slice %51 {offsets = [48, 0], sizes = [16, 128], strides = [1, 1]} : vector<64x128xf32> to vector<16x128xf32>
    %cst_30 = arith.constant 0.000000e+00 : f32
    %71 = vector.broadcast %cst_30 : f32 to vector<16x128xf32>
    %72 = arith.subf %71, %70 : vector<16x128xf32>
    %73 = math.exp %72 : vector<16x128xf32>
    %cst_31 = arith.constant 1.000000e+00 : f32
    %74 = vector.broadcast %cst_31 : f32 to vector<16x128xf32>
    %75 = arith.addf %74, %73 : vector<16x128xf32>
    %cst_32 = arith.constant 1.000000e+00 : f32
    %76 = vector.broadcast %cst_32 : f32 to vector<16x128xf32>
    %77 = arith.divf %76, %75 : vector<16x128xf32>
    %78 = arith.mulf %67, %43 : vector<16x128xf32>
    %79 = arith.mulf %59, %69 : vector<16x128xf32>
    %80 = arith.addf %78, %79 : vector<16x128xf32>
    %81 = math.tanh %80 : vector<16x128xf32>
    %82 = arith.mulf %77, %81 : vector<16x128xf32>
    %c2 = arith.constant 2 : index
    %c0_33 = arith.constant 0 : index
    %83 = vector.load %arg1[%c2, %c0_33] : memref<8x128xf32, #tpu.memory_space<vmem>>, vector<1x128xf32>
    %84 = vector.broadcast %83 : vector<1x128xf32> to vector<64x128xf32>
    %85 = arith.mulf %0, %84 : vector<64x128xf32>
    %86 = arith.addf %85, %1 : vector<64x128xf32>
    %cst_34 = arith.constant dense<0.000000e+00> : vector<64x128xf32>
    %87 = tpu.matmul %6, %82, %cst_34 {dimension_numbers = #tpu.dot_dimension_numbers<[1], [0], [0], [1], [0, 0, 1, 1], [], []>} : vector<64x16xf32>, vector<16x128xf32>, vector<64x128xf32> -> vector<64x128xf32>
    %88 = arith.addf %86, %87 : vector<64x128xf32>
    %89 = vector.extract_strided_slice %88 {offsets = [0, 0], sizes = [16, 128], strides = [1, 1]} : vector<64x128xf32> to vector<16x128xf32>
    %cst_35 = arith.constant 0.000000e+00 : f32
    %90 = vector.broadcast %cst_35 : f32 to vector<16x128xf32>
    %91 = arith.subf %90, %89 : vector<16x128xf32>
    %92 = math.exp %91 : vector<16x128xf32>
    %cst_36 = arith.constant 1.000000e+00 : f32
    %93 = vector.broadcast %cst_36 : f32 to vector<16x128xf32>
    %94 = arith.addf %93, %92 : vector<16x128xf32>
    %cst_37 = arith.constant 1.000000e+00 : f32
    %95 = vector.broadcast %cst_37 : f32 to vector<16x128xf32>
    %96 = arith.divf %95, %94 : vector<16x128xf32>
    %97 = vector.extract_strided_slice %88 {offsets = [16, 0], sizes = [16, 128], strides = [1, 1]} : vector<64x128xf32> to vector<16x128xf32>
    %cst_38 = arith.constant 0.000000e+00 : f32
    %98 = vector.broadcast %cst_38 : f32 to vector<16x128xf32>
    %99 = arith.subf %98, %97 : vector<16x128xf32>
    %100 = math.exp %99 : vector<16x128xf32>
    %cst_39 = arith.constant 1.000000e+00 : f32
    %101 = vector.broadcast %cst_39 : f32 to vector<16x128xf32>
    %102 = arith.addf %101, %100 : vector<16x128xf32>
    %cst_40 = arith.constant 1.000000e+00 : f32
    %103 = vector.broadcast %cst_40 : f32 to vector<16x128xf32>
    %104 = arith.divf %103, %102 : vector<16x128xf32>
    %105 = vector.extract_strided_slice %88 {offsets = [32, 0], sizes = [16, 128], strides = [1, 1]} : vector<64x128xf32> to vector<16x128xf32>
    %106 = math.tanh %105 : vector<16x128xf32>
    %107 = vector.extract_strided_slice %88 {offsets = [48, 0], sizes = [16, 128], strides = [1, 1]} : vector<64x128xf32> to vector<16x128xf32>
    %cst_41 = arith.constant 0.000000e+00 : f32
    %108 = vector.broadcast %cst_41 : f32 to vector<16x128xf32>
    %109 = arith.subf %108, %107 : vector<16x128xf32>
    %110 = math.exp %109 : vector<16x128xf32>
    %cst_42 = arith.constant 1.000000e+00 : f32
    %111 = vector.broadcast %cst_42 : f32 to vector<16x128xf32>
    %112 = arith.addf %111, %110 : vector<16x128xf32>
    %cst_43 = arith.constant 1.000000e+00 : f32
    %113 = vector.broadcast %cst_43 : f32 to vector<16x128xf32>
    %114 = arith.divf %113, %112 : vector<16x128xf32>
    %115 = arith.mulf %104, %80 : vector<16x128xf32>
    %116 = arith.mulf %96, %106 : vector<16x128xf32>
    %117 = arith.addf %115, %116 : vector<16x128xf32>
    %118 = math.tanh %117 : vector<16x128xf32>
    %119 = arith.mulf %114, %118 : vector<16x128xf32>
    %c3 = arith.constant 3 : index
    %c0_44 = arith.constant 0 : index
    %120 = vector.load %arg1[%c3, %c0_44] : memref<8x128xf32, #tpu.memory_space<vmem>>, vector<1x128xf32>
    %121 = vector.broadcast %120 : vector<1x128xf32> to vector<64x128xf32>
    %122 = arith.mulf %0, %121 : vector<64x128xf32>
    %123 = arith.addf %122, %1 : vector<64x128xf32>
    %cst_45 = arith.constant dense<0.000000e+00> : vector<64x128xf32>
    %124 = tpu.matmul %6, %119, %cst_45 {dimension_numbers = #tpu.dot_dimension_numbers<[1], [0], [0], [1], [0, 0, 1, 1], [], []>} : vector<64x16xf32>, vector<16x128xf32>, vector<64x128xf32> -> vector<64x128xf32>
    %125 = arith.addf %123, %124 : vector<64x128xf32>
    %126 = vector.extract_strided_slice %125 {offsets = [0, 0], sizes = [16, 128], strides = [1, 1]} : vector<64x128xf32> to vector<16x128xf32>
    %cst_46 = arith.constant 0.000000e+00 : f32
    %127 = vector.broadcast %cst_46 : f32 to vector<16x128xf32>
    %128 = arith.subf %127, %126 : vector<16x128xf32>
    %129 = math.exp %128 : vector<16x128xf32>
    %cst_47 = arith.constant 1.000000e+00 : f32
    %130 = vector.broadcast %cst_47 : f32 to vector<16x128xf32>
    %131 = arith.addf %130, %129 : vector<16x128xf32>
    %cst_48 = arith.constant 1.000000e+00 : f32
    %132 = vector.broadcast %cst_48 : f32 to vector<16x128xf32>
    %133 = arith.divf %132, %131 : vector<16x128xf32>
    %134 = vector.extract_strided_slice %125 {offsets = [16, 0], sizes = [16, 128], strides = [1, 1]} : vector<64x128xf32> to vector<16x128xf32>
    %cst_49 = arith.constant 0.000000e+00 : f32
    %135 = vector.broadcast %cst_49 : f32 to vector<16x128xf32>
    %136 = arith.subf %135, %134 : vector<16x128xf32>
    %137 = math.exp %136 : vector<16x128xf32>
    %cst_50 = arith.constant 1.000000e+00 : f32
    %138 = vector.broadcast %cst_50 : f32 to vector<16x128xf32>
    %139 = arith.addf %138, %137 : vector<16x128xf32>
    %cst_51 = arith.constant 1.000000e+00 : f32
    %140 = vector.broadcast %cst_51 : f32 to vector<16x128xf32>
    %141 = arith.divf %140, %139 : vector<16x128xf32>
    %142 = vector.extract_strided_slice %125 {offsets = [32, 0], sizes = [16, 128], strides = [1, 1]} : vector<64x128xf32> to vector<16x128xf32>
    %143 = math.tanh %142 : vector<16x128xf32>
    %144 = vector.extract_strided_slice %125 {offsets = [48, 0], sizes = [16, 128], strides = [1, 1]} : vector<64x128xf32> to vector<16x128xf32>
    %cst_52 = arith.constant 0.000000e+00 : f32
    %145 = vector.broadcast %cst_52 : f32 to vector<16x128xf32>
    %146 = arith.subf %145, %144 : vector<16x128xf32>
    %147 = math.exp %146 : vector<16x128xf32>
    %cst_53 = arith.constant 1.000000e+00 : f32
    %148 = vector.broadcast %cst_53 : f32 to vector<16x128xf32>
    %149 = arith.addf %148, %147 : vector<16x128xf32>
    %cst_54 = arith.constant 1.000000e+00 : f32
    %150 = vector.broadcast %cst_54 : f32 to vector<16x128xf32>
    %151 = arith.divf %150, %149 : vector<16x128xf32>
    %152 = arith.mulf %141, %117 : vector<16x128xf32>
    %153 = arith.mulf %133, %143 : vector<16x128xf32>
    %154 = arith.addf %152, %153 : vector<16x128xf32>
    %155 = math.tanh %154 : vector<16x128xf32>
    %156 = arith.mulf %151, %155 : vector<16x128xf32>
    %c4 = arith.constant 4 : index
    %c0_55 = arith.constant 0 : index
    %157 = vector.load %arg1[%c4, %c0_55] : memref<8x128xf32, #tpu.memory_space<vmem>>, vector<1x128xf32>
    %158 = vector.broadcast %157 : vector<1x128xf32> to vector<64x128xf32>
    %159 = arith.mulf %0, %158 : vector<64x128xf32>
    %160 = arith.addf %159, %1 : vector<64x128xf32>
    %cst_56 = arith.constant dense<0.000000e+00> : vector<64x128xf32>
    %161 = tpu.matmul %6, %156, %cst_56 {dimension_numbers = #tpu.dot_dimension_numbers<[1], [0], [0], [1], [0, 0, 1, 1], [], []>} : vector<64x16xf32>, vector<16x128xf32>, vector<64x128xf32> -> vector<64x128xf32>
    %162 = arith.addf %160, %161 : vector<64x128xf32>
    %163 = vector.extract_strided_slice %162 {offsets = [0, 0], sizes = [16, 128], strides = [1, 1]} : vector<64x128xf32> to vector<16x128xf32>
    %cst_57 = arith.constant 0.000000e+00 : f32
    %164 = vector.broadcast %cst_57 : f32 to vector<16x128xf32>
    %165 = arith.subf %164, %163 : vector<16x128xf32>
    %166 = math.exp %165 : vector<16x128xf32>
    %cst_58 = arith.constant 1.000000e+00 : f32
    %167 = vector.broadcast %cst_58 : f32 to vector<16x128xf32>
    %168 = arith.addf %167, %166 : vector<16x128xf32>
    %cst_59 = arith.constant 1.000000e+00 : f32
    %169 = vector.broadcast %cst_59 : f32 to vector<16x128xf32>
    %170 = arith.divf %169, %168 : vector<16x128xf32>
    %171 = vector.extract_strided_slice %162 {offsets = [16, 0], sizes = [16, 128], strides = [1, 1]} : vector<64x128xf32> to vector<16x128xf32>
    %cst_60 = arith.constant 0.000000e+00 : f32
    %172 = vector.broadcast %cst_60 : f32 to vector<16x128xf32>
    %173 = arith.subf %172, %171 : vector<16x128xf32>
    %174 = math.exp %173 : vector<16x128xf32>
    %cst_61 = arith.constant 1.000000e+00 : f32
    %175 = vector.broadcast %cst_61 : f32 to vector<16x128xf32>
    %176 = arith.addf %175, %174 : vector<16x128xf32>
    %cst_62 = arith.constant 1.000000e+00 : f32
    %177 = vector.broadcast %cst_62 : f32 to vector<16x128xf32>
    %178 = arith.divf %177, %176 : vector<16x128xf32>
    %179 = vector.extract_strided_slice %162 {offsets = [32, 0], sizes = [16, 128], strides = [1, 1]} : vector<64x128xf32> to vector<16x128xf32>
    %180 = math.tanh %179 : vector<16x128xf32>
    %181 = vector.extract_strided_slice %162 {offsets = [48, 0], sizes = [16, 128], strides = [1, 1]} : vector<64x128xf32> to vector<16x128xf32>
    %cst_63 = arith.constant 0.000000e+00 : f32
    %182 = vector.broadcast %cst_63 : f32 to vector<16x128xf32>
    %183 = arith.subf %182, %181 : vector<16x128xf32>
    %184 = math.exp %183 : vector<16x128xf32>
    %cst_64 = arith.constant 1.000000e+00 : f32
    %185 = vector.broadcast %cst_64 : f32 to vector<16x128xf32>
    %186 = arith.addf %185, %184 : vector<16x128xf32>
    %cst_65 = arith.constant 1.000000e+00 : f32
    %187 = vector.broadcast %cst_65 : f32 to vector<16x128xf32>
    %188 = arith.divf %187, %186 : vector<16x128xf32>
    %189 = arith.mulf %178, %154 : vector<16x128xf32>
    %190 = arith.mulf %170, %180 : vector<16x128xf32>
    %191 = arith.addf %189, %190 : vector<16x128xf32>
    %192 = math.tanh %191 : vector<16x128xf32>
    %193 = arith.mulf %188, %192 : vector<16x128xf32>
    %c5 = arith.constant 5 : index
    %c0_66 = arith.constant 0 : index
    %194 = vector.load %arg1[%c5, %c0_66] : memref<8x128xf32, #tpu.memory_space<vmem>>, vector<1x128xf32>
    %195 = vector.broadcast %194 : vector<1x128xf32> to vector<64x128xf32>
    %196 = arith.mulf %0, %195 : vector<64x128xf32>
    %197 = arith.addf %196, %1 : vector<64x128xf32>
    %cst_67 = arith.constant dense<0.000000e+00> : vector<64x128xf32>
    %198 = tpu.matmul %6, %193, %cst_67 {dimension_numbers = #tpu.dot_dimension_numbers<[1], [0], [0], [1], [0, 0, 1, 1], [], []>} : vector<64x16xf32>, vector<16x128xf32>, vector<64x128xf32> -> vector<64x128xf32>
    %199 = arith.addf %197, %198 : vector<64x128xf32>
    %200 = vector.extract_strided_slice %199 {offsets = [0, 0], sizes = [16, 128], strides = [1, 1]} : vector<64x128xf32> to vector<16x128xf32>
    %cst_68 = arith.constant 0.000000e+00 : f32
    %201 = vector.broadcast %cst_68 : f32 to vector<16x128xf32>
    %202 = arith.subf %201, %200 : vector<16x128xf32>
    %203 = math.exp %202 : vector<16x128xf32>
    %cst_69 = arith.constant 1.000000e+00 : f32
    %204 = vector.broadcast %cst_69 : f32 to vector<16x128xf32>
    %205 = arith.addf %204, %203 : vector<16x128xf32>
    %cst_70 = arith.constant 1.000000e+00 : f32
    %206 = vector.broadcast %cst_70 : f32 to vector<16x128xf32>
    %207 = arith.divf %206, %205 : vector<16x128xf32>
    %208 = vector.extract_strided_slice %199 {offsets = [16, 0], sizes = [16, 128], strides = [1, 1]} : vector<64x128xf32> to vector<16x128xf32>
    %cst_71 = arith.constant 0.000000e+00 : f32
    %209 = vector.broadcast %cst_71 : f32 to vector<16x128xf32>
    %210 = arith.subf %209, %208 : vector<16x128xf32>
    %211 = math.exp %210 : vector<16x128xf32>
    %cst_72 = arith.constant 1.000000e+00 : f32
    %212 = vector.broadcast %cst_72 : f32 to vector<16x128xf32>
    %213 = arith.addf %212, %211 : vector<16x128xf32>
    %cst_73 = arith.constant 1.000000e+00 : f32
    %214 = vector.broadcast %cst_73 : f32 to vector<16x128xf32>
    %215 = arith.divf %214, %213 : vector<16x128xf32>
    %216 = vector.extract_strided_slice %199 {offsets = [32, 0], sizes = [16, 128], strides = [1, 1]} : vector<64x128xf32> to vector<16x128xf32>
    %217 = math.tanh %216 : vector<16x128xf32>
    %218 = vector.extract_strided_slice %199 {offsets = [48, 0], sizes = [16, 128], strides = [1, 1]} : vector<64x128xf32> to vector<16x128xf32>
    %cst_74 = arith.constant 0.000000e+00 : f32
    %219 = vector.broadcast %cst_74 : f32 to vector<16x128xf32>
    %220 = arith.subf %219, %218 : vector<16x128xf32>
    %221 = math.exp %220 : vector<16x128xf32>
    %cst_75 = arith.constant 1.000000e+00 : f32
    %222 = vector.broadcast %cst_75 : f32 to vector<16x128xf32>
    %223 = arith.addf %222, %221 : vector<16x128xf32>
    %cst_76 = arith.constant 1.000000e+00 : f32
    %224 = vector.broadcast %cst_76 : f32 to vector<16x128xf32>
    %225 = arith.divf %224, %223 : vector<16x128xf32>
    %226 = arith.mulf %215, %191 : vector<16x128xf32>
    %227 = arith.mulf %207, %217 : vector<16x128xf32>
    %228 = arith.addf %226, %227 : vector<16x128xf32>
    %229 = math.tanh %228 : vector<16x128xf32>
    %230 = arith.mulf %225, %229 : vector<16x128xf32>
    %c6 = arith.constant 6 : index
    %c0_77 = arith.constant 0 : index
    %231 = vector.load %arg1[%c6, %c0_77] : memref<8x128xf32, #tpu.memory_space<vmem>>, vector<1x128xf32>
    %232 = vector.broadcast %231 : vector<1x128xf32> to vector<64x128xf32>
    %233 = arith.mulf %0, %232 : vector<64x128xf32>
    %234 = arith.addf %233, %1 : vector<64x128xf32>
    %cst_78 = arith.constant dense<0.000000e+00> : vector<64x128xf32>
    %235 = tpu.matmul %6, %230, %cst_78 {dimension_numbers = #tpu.dot_dimension_numbers<[1], [0], [0], [1], [0, 0, 1, 1], [], []>} : vector<64x16xf32>, vector<16x128xf32>, vector<64x128xf32> -> vector<64x128xf32>
    %236 = arith.addf %234, %235 : vector<64x128xf32>
    %237 = vector.extract_strided_slice %236 {offsets = [0, 0], sizes = [16, 128], strides = [1, 1]} : vector<64x128xf32> to vector<16x128xf32>
    %cst_79 = arith.constant 0.000000e+00 : f32
    %238 = vector.broadcast %cst_79 : f32 to vector<16x128xf32>
    %239 = arith.subf %238, %237 : vector<16x128xf32>
    %240 = math.exp %239 : vector<16x128xf32>
    %cst_80 = arith.constant 1.000000e+00 : f32
    %241 = vector.broadcast %cst_80 : f32 to vector<16x128xf32>
    %242 = arith.addf %241, %240 : vector<16x128xf32>
    %cst_81 = arith.constant 1.000000e+00 : f32
    %243 = vector.broadcast %cst_81 : f32 to vector<16x128xf32>
    %244 = arith.divf %243, %242 : vector<16x128xf32>
    %245 = vector.extract_strided_slice %236 {offsets = [16, 0], sizes = [16, 128], strides = [1, 1]} : vector<64x128xf32> to vector<16x128xf32>
    %cst_82 = arith.constant 0.000000e+00 : f32
    %246 = vector.broadcast %cst_82 : f32 to vector<16x128xf32>
    %247 = arith.subf %246, %245 : vector<16x128xf32>
    %248 = math.exp %247 : vector<16x128xf32>
    %cst_83 = arith.constant 1.000000e+00 : f32
    %249 = vector.broadcast %cst_83 : f32 to vector<16x128xf32>
    %250 = arith.addf %249, %248 : vector<16x128xf32>
    %cst_84 = arith.constant 1.000000e+00 : f32
    %251 = vector.broadcast %cst_84 : f32 to vector<16x128xf32>
    %252 = arith.divf %251, %250 : vector<16x128xf32>
    %253 = vector.extract_strided_slice %236 {offsets = [32, 0], sizes = [16, 128], strides = [1, 1]} : vector<64x128xf32> to vector<16x128xf32>
    %254 = math.tanh %253 : vector<16x128xf32>
    %255 = vector.extract_strided_slice %236 {offsets = [48, 0], sizes = [16, 128], strides = [1, 1]} : vector<64x128xf32> to vector<16x128xf32>
    %cst_85 = arith.constant 0.000000e+00 : f32
    %256 = vector.broadcast %cst_85 : f32 to vector<16x128xf32>
    %257 = arith.subf %256, %255 : vector<16x128xf32>
    %258 = math.exp %257 : vector<16x128xf32>
    %cst_86 = arith.constant 1.000000e+00 : f32
    %259 = vector.broadcast %cst_86 : f32 to vector<16x128xf32>
    %260 = arith.addf %259, %258 : vector<16x128xf32>
    %cst_87 = arith.constant 1.000000e+00 : f32
    %261 = vector.broadcast %cst_87 : f32 to vector<16x128xf32>
    %262 = arith.divf %261, %260 : vector<16x128xf32>
    %263 = arith.mulf %252, %228 : vector<16x128xf32>
    %264 = arith.mulf %244, %254 : vector<16x128xf32>
    %265 = arith.addf %263, %264 : vector<16x128xf32>
    %266 = math.tanh %265 : vector<16x128xf32>
    %267 = arith.mulf %262, %266 : vector<16x128xf32>
    %c7 = arith.constant 7 : index
    %c0_88 = arith.constant 0 : index
    %268 = vector.load %arg1[%c7, %c0_88] : memref<8x128xf32, #tpu.memory_space<vmem>>, vector<1x128xf32>
    %269 = vector.broadcast %268 : vector<1x128xf32> to vector<64x128xf32>
    %270 = arith.mulf %0, %269 : vector<64x128xf32>
    %271 = arith.addf %270, %1 : vector<64x128xf32>
    %cst_89 = arith.constant dense<0.000000e+00> : vector<64x128xf32>
    %272 = tpu.matmul %6, %267, %cst_89 {dimension_numbers = #tpu.dot_dimension_numbers<[1], [0], [0], [1], [0, 0, 1, 1], [], []>} : vector<64x16xf32>, vector<16x128xf32>, vector<64x128xf32> -> vector<64x128xf32>
    %273 = arith.addf %271, %272 : vector<64x128xf32>
    %274 = vector.extract_strided_slice %273 {offsets = [0, 0], sizes = [16, 128], strides = [1, 1]} : vector<64x128xf32> to vector<16x128xf32>
    %cst_90 = arith.constant 0.000000e+00 : f32
    %275 = vector.broadcast %cst_90 : f32 to vector<16x128xf32>
    %276 = arith.subf %275, %274 : vector<16x128xf32>
    %277 = math.exp %276 : vector<16x128xf32>
    %cst_91 = arith.constant 1.000000e+00 : f32
    %278 = vector.broadcast %cst_91 : f32 to vector<16x128xf32>
    %279 = arith.addf %278, %277 : vector<16x128xf32>
    %cst_92 = arith.constant 1.000000e+00 : f32
    %280 = vector.broadcast %cst_92 : f32 to vector<16x128xf32>
    %281 = arith.divf %280, %279 : vector<16x128xf32>
    %282 = vector.extract_strided_slice %273 {offsets = [16, 0], sizes = [16, 128], strides = [1, 1]} : vector<64x128xf32> to vector<16x128xf32>
    %cst_93 = arith.constant 0.000000e+00 : f32
    %283 = vector.broadcast %cst_93 : f32 to vector<16x128xf32>
    %284 = arith.subf %283, %282 : vector<16x128xf32>
    %285 = math.exp %284 : vector<16x128xf32>
    %cst_94 = arith.constant 1.000000e+00 : f32
    %286 = vector.broadcast %cst_94 : f32 to vector<16x128xf32>
    %287 = arith.addf %286, %285 : vector<16x128xf32>
    %cst_95 = arith.constant 1.000000e+00 : f32
    %288 = vector.broadcast %cst_95 : f32 to vector<16x128xf32>
    %289 = arith.divf %288, %287 : vector<16x128xf32>
    %290 = vector.extract_strided_slice %273 {offsets = [32, 0], sizes = [16, 128], strides = [1, 1]} : vector<64x128xf32> to vector<16x128xf32>
    %291 = math.tanh %290 : vector<16x128xf32>
    %292 = vector.extract_strided_slice %273 {offsets = [48, 0], sizes = [16, 128], strides = [1, 1]} : vector<64x128xf32> to vector<16x128xf32>
    %cst_96 = arith.constant 0.000000e+00 : f32
    %293 = vector.broadcast %cst_96 : f32 to vector<16x128xf32>
    %294 = arith.subf %293, %292 : vector<16x128xf32>
    %295 = math.exp %294 : vector<16x128xf32>
    %cst_97 = arith.constant 1.000000e+00 : f32
    %296 = vector.broadcast %cst_97 : f32 to vector<16x128xf32>
    %297 = arith.addf %296, %295 : vector<16x128xf32>
    %cst_98 = arith.constant 1.000000e+00 : f32
    %298 = vector.broadcast %cst_98 : f32 to vector<16x128xf32>
    %299 = arith.divf %298, %297 : vector<16x128xf32>
    %300 = arith.mulf %289, %265 : vector<16x128xf32>
    %301 = arith.mulf %281, %291 : vector<16x128xf32>
    %302 = arith.addf %300, %301 : vector<16x128xf32>
    %303 = math.tanh %302 : vector<16x128xf32>
    %304 = arith.mulf %299, %303 : vector<16x128xf32>
    %c7_99 = arith.constant 7 : index
    %c0_100 = arith.constant 0 : index
    %305 = vector.load %arg1[%c7_99, %c0_100] : memref<8x128xf32, #tpu.memory_space<vmem>>, vector<1x128xf32>
    %306 = vector.broadcast %305 : vector<1x128xf32> to vector<64x128xf32>
    %307 = arith.mulf %2, %306 : vector<64x128xf32>
    %308 = arith.addf %307, %3 : vector<64x128xf32>
    %309 = vector.extract_strided_slice %308 {offsets = [0, 0], sizes = [16, 128], strides = [1, 1]} : vector<64x128xf32> to vector<16x128xf32>
    %cst_101 = arith.constant 0.000000e+00 : f32
    %310 = vector.broadcast %cst_101 : f32 to vector<16x128xf32>
    %311 = arith.subf %310, %309 : vector<16x128xf32>
    %312 = math.exp %311 : vector<16x128xf32>
    %cst_102 = arith.constant 1.000000e+00 : f32
    %313 = vector.broadcast %cst_102 : f32 to vector<16x128xf32>
    %314 = arith.addf %313, %312 : vector<16x128xf32>
    %cst_103 = arith.constant 1.000000e+00 : f32
    %315 = vector.broadcast %cst_103 : f32 to vector<16x128xf32>
    %316 = arith.divf %315, %314 : vector<16x128xf32>
    %317 = vector.extract_strided_slice %308 {offsets = [32, 0], sizes = [16, 128], strides = [1, 1]} : vector<64x128xf32> to vector<16x128xf32>
    %318 = math.tanh %317 : vector<16x128xf32>
    %319 = vector.extract_strided_slice %308 {offsets = [48, 0], sizes = [16, 128], strides = [1, 1]} : vector<64x128xf32> to vector<16x128xf32>
    %cst_104 = arith.constant 0.000000e+00 : f32
    %320 = vector.broadcast %cst_104 : f32 to vector<16x128xf32>
    %321 = arith.subf %320, %319 : vector<16x128xf32>
    %322 = math.exp %321 : vector<16x128xf32>
    %cst_105 = arith.constant 1.000000e+00 : f32
    %323 = vector.broadcast %cst_105 : f32 to vector<16x128xf32>
    %324 = arith.addf %323, %322 : vector<16x128xf32>
    %cst_106 = arith.constant 1.000000e+00 : f32
    %325 = vector.broadcast %cst_106 : f32 to vector<16x128xf32>
    %326 = arith.divf %325, %324 : vector<16x128xf32>
    %327 = arith.mulf %316, %318 : vector<16x128xf32>
    %328 = math.tanh %327 : vector<16x128xf32>
    %329 = arith.mulf %326, %328 : vector<16x128xf32>
    %330 = tpu.concatenate %304, %329 in 0 : vector<16x128xf32>, vector<16x128xf32> -> vector<32x128xf32>
    %cst_107 = arith.constant dense<0.000000e+00> : vector<16x128xf32>
    %331 = tpu.matmul %8, %330, %cst_107 {dimension_numbers = #tpu.dot_dimension_numbers<[1], [0], [0], [1], [0, 0, 1, 1], [], []>} : vector<16x32xf32>, vector<32x128xf32>, vector<16x128xf32> -> vector<16x128xf32>
    %332 = arith.addf %331, %4 : vector<16x128xf32>
    %cst_108 = arith.constant 0.000000e+00 : f32
    %333 = vector.broadcast %cst_108 : f32 to vector<16x128xf32>
    %334 = arith.maximumf %332, %333 : vector<16x128xf32>
    %cst_109 = arith.constant dense<0.000000e+00> : vector<32x128xf32>
    %335 = tpu.matmul %7, %334, %cst_109 {dimension_numbers = #tpu.dot_dimension_numbers<[1], [0], [0], [1], [0, 0, 1, 1], [], []>} : vector<32x16xf32>, vector<16x128xf32>, vector<32x128xf32> -> vector<32x128xf32>
    %336 = arith.addf %335, %5 : vector<32x128xf32>
    %337 = vector.extract_strided_slice %336 {offsets = [0, 0], sizes = [16, 128], strides = [1, 1]} : vector<32x128xf32> to vector<16x128xf32>
    %338 = vector.extract_strided_slice %336 {offsets = [16, 0], sizes = [16, 128], strides = [1, 1]} : vector<32x128xf32> to vector<16x128xf32>
    %cst_110 = arith.constant 5.000000e-01 : f32
    %339 = vector.broadcast %cst_110 : f32 to vector<16x128xf32>
    %340 = arith.mulf %338, %339 : vector<16x128xf32>
    %341 = math.exp %340 : vector<16x128xf32>
    %342 = arith.mulf %9, %341 : vector<16x128xf32>
    %343 = arith.addf %342, %337 : vector<16x128xf32>
    %c0_111 = arith.constant 0 : index
    %c0_112 = arith.constant 0 : index
    %344 = vector.load %arg4[%c0_111, %c0_112] : memref<48x128xf32, #tpu.memory_space<vmem>>, vector<16x128xf32>
    tpu.vector_store %arg4[%c0_111, %c0_112], %343 {strides = array<i32>} : memref<48x128xf32, #tpu.memory_space<vmem>>, vector<16x128xf32>,
    %c16 = arith.constant 16 : index
    %c0_113 = arith.constant 0 : index
    %345 = vector.load %arg4[%c16, %c0_113] : memref<48x128xf32, #tpu.memory_space<vmem>>, vector<16x128xf32>
    tpu.vector_store %arg4[%c16, %c0_113], %337 {strides = array<i32>} : memref<48x128xf32, #tpu.memory_space<vmem>>, vector<16x128xf32>,
    %c32 = arith.constant 32 : index
    %c0_114 = arith.constant 0 : index
    %346 = vector.load %arg4[%c32, %c0_114] : memref<48x128xf32, #tpu.memory_space<vmem>>, vector<16x128xf32>
    tpu.vector_store %arg4[%c32, %c0_114], %338 {strides = array<i32>} : memref<48x128xf32, #tpu.memory_space<vmem>>, vector<16x128xf32>,
    return
  }
  func.func @transform_0(%arg0: i32) -> (i32, i32) {
    %c0_i32 = arith.constant 0 : i32
    %c0_i32_0 = arith.constant 0 : i32
    return %c0_i32, %arg0 : i32, i32
  }
  func.func @transform_1(%arg0: i32) -> (i32, i32) {
    %c0_i32 = arith.constant 0 : i32
    %c0_i32_0 = arith.constant 0 : i32
    return %c0_i32, %arg0 : i32, i32
  }
  func.func @transform_2(%arg0: i32) -> (i32, i32) {
    %c0_i32 = arith.constant 0 : i32
    %c0_i32_0 = arith.constant 0 : i32
    %c0_i32_1 = arith.constant 0 : i32
    return %c0_i32, %c0_i32_0 : i32, i32
  }
  func.func @transform_3(%arg0: i32) -> (i32, i32) {
    %c0_i32 = arith.constant 0 : i32
    %c0_i32_0 = arith.constant 0 : i32
    return %c0_i32, %arg0 : i32, i32
  }
}

</mosaic_0001>

<llo_original>
// kernel: encoder_forward.1
$region0: #{encoder_forward.1}
  #allocation0 [shape = 'u32[]', space=smem, size = 0x4, offset = 0x4, fixed_abs, tag = 'smem constant byte address 0x4 - core index']
  #allocation1 [shape = 'u32[72,128]{1,0:T(1,128)}', space=vmem, size = 0x9000, scoped, tag = 'internal scratch']
  %s0 = inlined_call_operand.vmem [shape: f32[8,128], index: 0, kind: input, shape index: {}]
  %s1 = inlined_call_operand.vmem [shape: f32[16,128], index: 1, kind: input, shape index: {}]
  %s2 = inlined_call_operand.vmem [shape: f32[416,128], index: 2, kind: input, shape index: {}]
  %s3 = inlined_call_operand.vmem [shape: f32[48,128], index: 3, kind: output, shape index: {}]
  %s4 = sld [smem:[#allocation0]]
  $region22: #{encoder_forward.1} parent=0
    _
  %s6 = ssub.s32 1, %s4
  %s7 = scalar_select 0, %s6, %s4
  // Predicated region
  $region2: #{encoder_forward.1} parent=0 // pred_check
    _
  $region3: #{encoder_forward.1} parent=0 // pred_check_branch
    %9 = sbr.rel (0) target = $region5
  $region4: #{encoder_forward.1} parent=0 // pred_region
    _
  $region5: #{encoder_forward.1} parent=0 // pred_fallthru
    _
  // Predicated region
  $region6: #{encoder_forward.1} parent=0 // pred_check
    _
  $region7: #{encoder_forward.1} parent=0 // pred_check_branch
    %11 = sbr.rel (0) target = $region9
  $region8: #{encoder_forward.1} parent=0 // pred_region
    _
  $region9: #{encoder_forward.1} parent=0 // pred_fallthru
    _
  // Predicated region
  $region10: #{encoder_forward.1} parent=0 // pred_check
    _
  $region11: #{encoder_forward.1} parent=0 // pred_check_branch
    %13 = sbr.rel (0) target = $region13
  $region12: #{encoder_forward.1} parent=0 // pred_region
    _
  $region13: #{encoder_forward.1} parent=0 // pred_fallthru
    _
  %v14 = vld [vmem:[%s2] sm:$0xff]
  %v15 = vld [vmem:[%s2 + $0x8] sm:$0xff]
  %v16 = vld [vmem:[%s2 + $0x10] sm:$0xff]
  %v17 = vld [vmem:[%s2 + $0x18] sm:$0xff]
  %v18 = vld [vmem:[%s2 + $0x20] sm:$0xff]
  %v19 = vld [vmem:[%s2 + $0x28] sm:$0xff]
  %v20 = vld [vmem:[%s2 + $0x30] sm:$0xff]
  %v21 = vld [vmem:[%s2 + $0x38] sm:$0xff]
  %v22 = vld [vmem:[%s2 + $0x40] sm:$0xff]
  %v23 = vld [vmem:[%s2 + $0x48] sm:$0xff]
  %v24 = vld [vmem:[%s2 + $0x50] sm:$0xff]
  %v25 = vld [vmem:[%s2 + $0x58] sm:$0xff]
  %v26 = vld [vmem:[%s2 + $0x60] sm:$0xff]
  %v27 = vld [vmem:[%s2 + $0x68] sm:$0xff]
  %v28 = vld [vmem:[%s2 + $0x70] sm:$0xff]
  %v29 = vld [vmem:[%s2 + $0x78] sm:$0xff]
  %v30 = vld [vmem:[%s2 + $0x80] sm:$0xff]
  %v31 = vld [vmem:[%s2 + $0x88] sm:$0xff]
  %v32 = vld [vmem:[%s2 + $0xa0] sm:$0xff]
  %v33 = vld [vmem:[%s2 + $0xa8] sm:$0xff]
  %v34 = vld [vmem:[%s2 + $0xb0] sm:$0xff]
  %v35 = vld [vmem:[%s2 + $0xb8] sm:$0xff]
  %v36 = vld [vmem:[%s2 + $0xc0] sm:$0xff]
  %v37 = vld [vmem:[%s2 + $0xc8] sm:$0xff]
  %v38 = vld [vmem:[%s2 + $0xe0] sm:$0xff]
  %v39 = vld [vmem:[%s2 + $0xe8] sm:$0xff]
  %v40 = vld [vmem:[%s2 + $0xf0] sm:$0xff]
  %v41 = vld [vmem:[%s2 + $0xf8] sm:$0xff]
  %v42 = vld [vmem:[%s2 + $0x100] sm:$0xff]
  %v43 = vld [vmem:[%s2 + $0x108] sm:$0xff]
  %v44 = vld [vmem:[%s2 + $0x110] sm:$0xff]
  %v45 = vld [vmem:[%s2 + $0x118] sm:$0xff]
  %v46 = vld [vmem:[%s2 + $0x120] sm:$0xff]
  %v47 = vld [vmem:[%s2 + $0x128] sm:$0xff]
  %v48 = vld [vmem:[%s2 + $0x130] sm:$0xff]
  %v49 = vld [vmem:[%s2 + $0x138] sm:$0xff]
  %v50 = vld [vmem:[%s2 + $0x140] sm:$0xff]
  %v51 = vld [vmem:[%s2 + $0x148] sm:$0xff]
  %v52 = vld [vmem:[%s2 + $0x150] sm:$0xff]
  %v53 = vld [vmem:[%s2 + $0x158] sm:$0xff]
  %v54 = vld [vmem:[%s2 + $0x160] sm:$0xff]
  %v55 = vld [vmem:[%s2 + $0x168] sm:$0xff]
  %v56 = vld [vmem:[%s2 + $0x170] sm:$0xff]
  %v57 = vld [vmem:[%s2 + $0x178] sm:$0xff]
  %v58 = vld [vmem:[%s2 + $0x180] sm:$0xff]
  %v59 = vld [vmem:[%s2 + $0x188] sm:$0xff]
  %v60 = vld [vmem:[%s2 + $0x190] sm:$0xff]
  %v61 = vld [vmem:[%s2 + $0x198] sm:$0xff]
  %v62 = vld [vmem:[%s1] sm:$0xff]
  %v63 = vld [vmem:[%s1 + $0x8] sm:$0xff]
  %v64 = vld [vmem:[%s0] sm:$0x1]
  %v65 = vperm.slane %v64, 0
  %v66 = vmul.f32 %v14, %v65
  %v67 = vmul.f32 %v15, %v65
  %v68 = vmul.f32 %v16, %v65
  %v69 = vmul.f32 %v17, %v65
  %v70 = vmul.f32 %v18, %v65
  %v71 = vmul.f32 %v19, %v65
  %v72 = vmul.f32 %v20, %v65
  %v73 = vmul.f32 %v21, %v65
  %v74 = vadd.f32 %v66, %v22
  %v75 = vadd.f32 %v67, %v23
  %v76 = vadd.f32 %v68, %v24
  %v77 = vadd.f32 %v69, %v25
  %v78 = vadd.f32 %v70, %v26
  %v79 = vadd.f32 %v71, %v27
  %v80 = vadd.f32 %v72, %v28
  %v81 = vadd.f32 %v73, %v29
  %v82 = vsub.f32 0.0, %v74
  %v83 = vsub.f32 0.0, %v75
  %v84 = vmul.f32 %v82, 1.442695
  %v85 = vpow.pop %v84
  %v86 = vmul.f32 %v83, 1.442695
  %v87 = vpow.pop %v86
  %v88 = vadd.f32 %v85, 1.0
  %v89 = vadd.f32 %v87, 1.0
  %v90 = vrcp.pop %v88
  %v91 = vmul.f32 %v88, %v90
  %v92 = vsub.f32 1.0, %v91
  %v93 = vmul.f32 %v90, %v92
  %v94 = vadd.f32 %v90, %v93
  %vm95 = vweird.f32 %v88
  %vm96 = vweird.f32 %v90
  %vm97 = vmor %vm95, %vm96
  %v98 = vsel %vm97, %v90, %v94
  %v99 = vand.u32 2147483647, %v88
  %vm100 = vcmp.eq.f32.partialorder %v99, 8.507059e+37
  %v101 = vand.u32 %v88, 2147483648
  %v102 = vor.u32 1.1754944e-38, %v101
  %v103 = vsel %vm100, %v102, %v98
  %v104 = vmul.f32 1.0, %v103
  %v105 = vrcp.pop %v89
  %v106 = vmul.f32 %v89, %v105
  %v107 = vsub.f32 1.0, %v106
  %v108 = vmul.f32 %v105, %v107
  %v109 = vadd.f32 %v105, %v108
  %vm110 = vweird.f32 %v89
  %vm111 = vweird.f32 %v105
  %vm112 = vmor %vm110, %vm111
  %v113 = vsel %vm112, %v105, %v109
  %v114 = vand.u32 2147483647, %v89
  %vm115 = vcmp.eq.f32.partialorder %v114, 8.507059e+37
  %v116 = vand.u32 %v89, 2147483648
  %v117 = vor.u32 1.1754944e-38, %v116
  %v118 = vsel %vm115, %v117, %v113
  %v119 = vmul.f32 1.0, %v118
  %v120 = vsub.f32 0.0, %v76
  %v121 = vsub.f32 0.0, %v77
  %v122 = vmul.f32 %v120, 1.442695
  %v123 = vpow.pop %v122
  %v124 = vmul.f32 %v121, 1.442695
  %v125 = vpow.pop %v124
  %v126 = vadd.f32 %v123, 1.0
  %v127 = vadd.f32 %v125, 1.0
  %v128 = vrcp.pop %v126
  %v129 = vmul.f32 %v126, %v128
  %v130 = vsub.f32 1.0, %v129
  %v131 = vmul.f32 %v128, %v130
  %v132 = vadd.f32 %v128, %v131
  %vm133 = vweird.f32 %v126
  %vm134 = vweird.f32 %v128
  %vm135 = vmor %vm133, %vm134
  %v136 = vsel %vm135, %v128, %v132
  %v137 = vand.u32 2147483647, %v126
  %vm138 = vcmp.eq.f32.partialorder %v137, 8.507059e+37
  %v139 = vand.u32 %v126, 2147483648
  %v140 = vor.u32 1.1754944e-38, %v139
  %v141 = vsel %vm138, %v140, %v136
  %v142 = vmul.f32 1.0, %v141
  %v143 = vrcp.pop %v127
  %v144 = vmul.f32 %v127, %v143
  %v145 = vsub.f32 1.0, %v144
  %v146 = vmul.f32 %v143, %v145
  %v147 = vadd.f32 %v143, %v146
  %vm148 = vweird.f32 %v127
  %vm149 = vweird.f32 %v143
  %vm150 = vmor %vm148, %vm149
  %v151 = vsel %vm150, %v143, %v147
  %v152 = vand.u32 2147483647, %v127
  %vm153 = vcmp.eq.f32.partialorder %v152, 8.507059e+37
  %v154 = vand.u32 %v127, 2147483648
  %v155 = vor.u32 1.1754944e-38, %v154
  %v156 = vsel %vm153, %v155, %v151
  %v157 = vmul.f32 1.0, %v156
  %v158 = vtanh.pop %v78
  %v159 = vtanh.pop %v79
  %v160 = vsub.f32 0.0, %v80
  %v161 = vsub.f32 0.0, %v81
  %v162 = vmul.f32 %v160, 1.442695
  %v163 = vpow.pop %v162
  %v164 = vmul.f32 %v161, 1.442695
  %v165 = vpow.pop %v164
  %v166 = vadd.f32 %v163, 1.0
  %v167 = vadd.f32 %v165, 1.0
  %v168 = vrcp.pop %v166
  %v169 = vmul.f32 %v166, %v168
  %v170 = vsub.f32 1.0, %v169
  %v171 = vmul.f32 %v168, %v170
  %v172 = vadd.f32 %v168, %v171
  %vm173 = vweird.f32 %v166
  %vm174 = vweird.f32 %v168
  %vm175 = vmor %vm173, %vm174
  %v176 = vsel %vm175, %v168, %v172
  %v177 = vand.u32 2147483647, %v166
  %vm178 = vcmp.eq.f32.partialorder %v177, 8.507059e+37
  %v179 = vand.u32 %v166, 2147483648
  %v180 = vor.u32 1.1754944e-38, %v179
  %v181 = vsel %vm178, %v180, %v176
  %v182 = vmul.f32 1.0, %v181
  %v183 = vrcp.pop %v167
  %v184 = vmul.f32 %v167, %v183
  %v185 = vsub.f32 1.0, %v184
  %v186 = vmul.f32 %v183, %v185
  %v187 = vadd.f32 %v183, %v186
  %vm188 = vweird.f32 %v167
  %vm189 = vweird.f32 %v183
  %vm190 = vmor %vm188, %vm189
  %v191 = vsel %vm190, %v183, %v187
  %v192 = vand.u32 2147483647, %v167
  %vm193 = vcmp.eq.f32.partialorder %v192, 8.507059e+37
  %v194 = vand.u32 %v167, 2147483648
  %v195 = vor.u32 1.1754944e-38, %v194
  %v196 = vsel %vm193, %v195, %v191
  %v197 = vmul.f32 1.0, %v196
  %v198 = vmul.f32 %v142, 0.0
  %v199 = vmul.f32 %v157, 0.0
  %v200 = vmul.f32 %v104, %v158
  %v201 = vmul.f32 %v119, %v159
  %v202 = vadd.f32 %v198, %v200
  %v203 = vadd.f32 %v199, %v201
  %v204 = vtanh.pop %v202
  %v205 = vtanh.pop %v203
  %v206 = vmul.f32 %v182, %v204
  %v207 = vmul.f32 %v197, %v205
  %v208 = vld [vmem:[%s0 + $0x1] sm:$0x1]
  %v209 = vperm.slane %v208, 0
  %v210 = vmul.f32 %v14, %v209
  %v211 = vmul.f32 %v15, %v209
  %v212 = vmul.f32 %v16, %v209
  %v213 = vmul.f32 %v17, %v209
  %v214 = vmul.f32 %v18, %v209
  %v215 = vmul.f32 %v19, %v209
  %v216 = vmul.f32 %v20, %v209
  %v217 = vmul.f32 %v21, %v209
  %v218 = vadd.f32 %v210, %v22
  %v219 = vadd.f32 %v211, %v23
  %v220 = vadd.f32 %v212, %v24
  %v221 = vadd.f32 %v213, %v25
  %v222 = vadd.f32 %v214, %v26
  %v223 = vadd.f32 %v215, %v27
  %v224 = vadd.f32 %v216, %v28
  %v225 = vadd.f32 %v217, %v29
  %vm226 = vcmask 130048
  %v228 = vsel %vm226, %v48, 0
  %v231 = vsel %vm226, %v49, 0
  %v234 = vsel %vm226, %v50, 0
  %v237 = vsel %vm226, %v51, 0
  %v240 = vsel %vm226, %v52, 0
  %v243 = vsel %vm226, %v53, 0
  %v246 = vsel %vm226, %v54, 0
  %v249 = vsel %vm226, %v55, 0
  %251 = vmatpush.msra.mxu0 0.0
  %252 = vmatpush.msra.mxu0 0.0
  %253 = vmatpush.msra.mxu0 0.0
  %254 = vmatpush.msra.mxu0 0.0
  %255 = vmatpush.msra.mxu0 0.0
  %256 = vmatpush.msra.mxu0 0.0
  %257 = vmatpush.msra.mxu0 0.0
  %258 = vmatpush.msra.mxu0 0.0
  %259 = vmatpush.msra.mxu0 0.0
  %260 = vmatpush.msra.mxu0 0.0
  %261 = vmatpush.msra.mxu0 0.0
  %262 = vmatpush.msra.mxu0 0.0
  %263 = vmatpush.msra.mxu0 0.0
  %264 = vmatpush.msra.mxu0 0.0
  %265 = vmatpush.msra.mxu0 %v207
  %266 = vmatpush.msra.mxu0 %v206
  %267 = vmatmul.f32.gmra.mxu0 %v228
  %v268 = vpop.f32.mrf.mxu0
  %v269 = vadd.f32 0.0, %v268
  %270 = vmatmul.f32.gmra.mxu0 %v231
  %v271 = vpop.f32.mrf.mxu0
  %v272 = vadd.f32 0.0, %v271
  %273 = vmatmul.f32.gmra.mxu0 %v234
  %v274 = vpop.f32.mrf.mxu0
  %v275 = vadd.f32 0.0, %v274
  %276 = vmatmul.f32.gmra.mxu0 %v237
  %v277 = vpop.f32.mrf.mxu0
  %v278 = vadd.f32 0.0, %v277
  %279 = vmatmul.f32.gmra.mxu0 %v240
  %v280 = vpop.f32.mrf.mxu0
  %v281 = vadd.f32 0.0, %v280
  %282 = vmatmul.f32.gmra.mxu0 %v243
  %v283 = vpop.f32.mrf.mxu0
  %v284 = vadd.f32 0.0, %v283
  %285 = vmatmul.f32.gmra.mxu0 %v246
  %v286 = vpop.f32.mrf.mxu0
  %v287 = vadd.f32 0.0, %v286
  %288 = vmatmul.f32.gmra.mxu0 %v249
  %v289 = vpop.f32.mrf.mxu0
  %v290 = vadd.f32 0.0, %v289
  %291 = vdwg.mxu0
  %v292 = vadd.f32 %v218, %v269
  %v293 = vadd.f32 %v219, %v272
  %v294 = vadd.f32 %v220, %v275
  %v295 = vadd.f32 %v221, %v278
  %v296 = vadd.f32 %v222, %v281
  %v297 = vadd.f32 %v223, %v284
  %v298 = vadd.f32 %v224, %v287
  %v299 = vadd.f32 %v225, %v290
  %v300 = vsub.f32 0.0, %v292
  %v301 = vsub.f32 0.0, %v293
  %v302 = vmul.f32 %v300, 1.442695
  %v303 = vpow.pop %v302
  %v304 = vmul.f32 %v301, 1.442695
  %v305 = vpow.pop %v304
  %v306 = vadd.f32 %v303, 1.0
  %v307 = vadd.f32 %v305, 1.0
  %v308 = vrcp.pop %v306
  %v309 = vmul.f32 %v306, %v308
  %v310 = vsub.f32 1.0, %v309
  %v311 = vmul.f32 %v308, %v310
  %v312 = vadd.f32 %v308, %v311
  %vm313 = vweird.f32 %v306
  %vm314 = vweird.f32 %v308
  %vm315 = vmor %vm313, %vm314
  %v316 = vsel %vm315, %v308, %v312
  %v317 = vand.u32 2147483647, %v306
  %vm318 = vcmp.eq.f32.partialorder %v317, 8.507059e+37
  %v319 = vand.u32 %v306, 2147483648
  %v320 = vor.u32 1.1754944e-38, %v319
  %v321 = vsel %vm318, %v320, %v316
  %v322 = vmul.f32 1.0, %v321
  %v323 = vrcp.pop %v307
  %v324 = vmul.f32 %v307, %v323
  %v325 = vsub.f32 1.0, %v324
  %v326 = vmul.f32 %v323, %v325
  %v327 = vadd.f32 %v323, %v326
  %vm328 = vweird.f32 %v307
  %vm329 = vweird.f32 %v323
  %vm330 = vmor %vm328, %vm329
  %v331 = vsel %vm330, %v323, %v327
  %v332 = vand.u32 2147483647, %v307
  %vm333 = vcmp.eq.f32.partialorder %v332, 8.507059e+37
  %v334 = vand.u32 %v307, 2147483648
  %v335 = vor.u32 1.1754944e-38, %v334
  %v336 = vsel %vm333, %v335, %v331
  %v337 = vmul.f32 1.0, %v336
  %v338 = vsub.f32 0.0, %v294
  %v339 = vsub.f32 0.0, %v295
  %v340 = vmul.f32 %v338, 1.442695
  %v341 = vpow.pop %v340
  %v342 = vmul.f32 %v339, 1.442695
  %v343 = vpow.pop %v342
  %v344 = vadd.f32 %v341, 1.0
  %v345 = vadd.f32 %v343, 1.0
  %v346 = vrcp.pop %v344
  %v347 = vmul.f32 %v344, %v346
  %v348 = vsub.f32 1.0, %v347
  %v349 = vmul.f32 %v346, %v348
  %v350 = vadd.f32 %v346, %v349
  %vm351 = vweird.f32 %v344
  %vm352 = vweird.f32 %v346
  %vm353 = vmor %vm351, %vm352
  %v354 = vsel %vm353, %v346, %v350
  %v355 = vand.u32 2147483647, %v344
  %vm356 = vcmp.eq.f32.partialorder %v355, 8.507059e+37
  %v357 = vand.u32 %v344, 2147483648
  %v358 = vor.u32 1.1754944e-38, %v357
  %v359 = vsel %vm356, %v358, %v354
  %v360 = vmul.f32 1.0, %v359
  %v361 = vrcp.pop %v345
  %v362 = vmul.f32 %v345, %v361
  %v363 = vsub.f32 1.0, %v362
  %v364 = vmul.f32 %v361, %v363
  %v365 = vadd.f32 %v361, %v364
  %vm366 = vweird.f32 %v345
  %vm367 = vweird.f32 %v361
  %vm368 = vmor %vm366, %vm367
  %v369 = vsel %vm368, %v361, %v365
  %v370 = vand.u32 2147483647, %v345
  %vm371 = vcmp.eq.f32.partialorder %v370, 8.507059e+37
  %v372 = vand.u32 %v345, 2147483648
  %v373 = vor.u32 1.1754944e-38, %v372
  %v374 = vsel %vm371, %v373, %v369
  %v375 = vmul.f32 1.0, %v374
  %v376 = vtanh.pop %v296
  %v377 = vtanh.pop %v297
  %v378 = vsub.f32 0.0, %v298
  %v379 = vsub.f32 0.0, %v299
  %v380 = vmul.f32 %v378, 1.442695
  %v381 = vpow.pop %v380
  %v382 = vmul.f32 %v379, 1.442695
  %v383 = vpow.pop %v382
  %v384 = vadd.f32 %v381, 1.0
  %v385 = vadd.f32 %v383, 1.0
  %v386 = vrcp.pop %v384
  %v387 = vmul.f32 %v384, %v386
  %v388 = vsub.f32 1.0, %v387
  %v389 = vmul.f32 %v386, %v388
  %v390 = vadd.f32 %v386, %v389
  %vm391 = vweird.f32 %v384
  %vm392 = vweird.f32 %v386
  %vm393 = vmor %vm391, %vm392
  %v394 = vsel %vm393, %v386, %v390
  %v395 = vand.u32 2147483647, %v384
  %vm396 = vcmp.eq.f32.partialorder %v395, 8.507059e+37
  %v397 = vand.u32 %v384, 2147483648
  %v398 = vor.u32 1.1754944e-38, %v397
  %v399 = vsel %vm396, %v398, %v394
  %v400 = vmul.f32 1.0, %v399
  %v401 = vrcp.pop %v385
  %v402 = vmul.f32 %v385, %v401
  %v403 = vsub.f32 1.0, %v402
  %v404 = vmul.f32 %v401, %v403
  %v405 = vadd.f32 %v401, %v404
  %vm406 = vweird.f32 %v385
  %vm407 = vweird.f32 %v401
  %vm408 = vmor %vm406, %vm407
  %v409 = vsel %vm408, %v401, %v405
  %v410 = vand.u32 2147483647, %v385
  %vm411 = vcmp.eq.f32.partialorder %v410, 8.507059e+37
  %v412 = vand.u32 %v385, 2147483648
  %v413 = vor.u32 1.1754944e-38, %v412
  %v414 = vsel %vm411, %v413, %v409
  %v415 = vmul.f32 1.0, %v414
  %v416 = vmul.f32 %v360, %v202
  %v417 = vmul.f32 %v375, %v203
  %v418 = vmul.f32 %v322, %v376
  %v419 = vmul.f32 %v337, %v377
  %v420 = vadd.f32 %v416, %v418
  %v421 = vadd.f32 %v417, %v419
  %v422 = vtanh.pop %v420
  %v423 = vtanh.pop %v421
  %v424 = vmul.f32 %v400, %v422
  %v425 = vmul.f32 %v415, %v423
  %v426 = vld [vmem:[%s0 + $0x2] sm:$0x1]
  %v427 = vperm.slane %v426, 0
  %v428 = vmul.f32 %v14, %v427
  %v429 = vmul.f32 %v15, %v427
  %v430 = vmul.f32 %v16, %v427
  %v431 = vmul.f32 %v17, %v427
  %v432 = vmul.f32 %v18, %v427
  %v433 = vmul.f32 %v19, %v427
  %v434 = vmul.f32 %v20, %v427
  %v435 = vmul.f32 %v21, %v427
  %v436 = vadd.f32 %v428, %v22
  %v437 = vadd.f32 %v429, %v23
  %v438 = vadd.f32 %v430, %v24
  %v439 = vadd.f32 %v431, %v25
  %v440 = vadd.f32 %v432, %v26
  %v441 = vadd.f32 %v433, %v27
  %v442 = vadd.f32 %v434, %v28
  %v443 = vadd.f32 %v435, %v29
  %444 = vmatpush.msra.mxu0 0.0
  %445 = vmatpush.msra.mxu0 0.0
  %446 = vmatpush.msra.mxu0 0.0
  %447 = vmatpush.msra.mxu0 0.0
  %448 = vmatpush.msra.mxu0 0.0
  %449 = vmatpush.msra.mxu0 0.0
  %450 = vmatpush.msra.mxu0 0.0
  %451 = vmatpush.msra.mxu0 0.0
  %452 = vmatpush.msra.mxu0 0.0
  %453 = vmatpush.msra.mxu0 0.0
  %454 = vmatpush.msra.mxu0 0.0
  %455 = vmatpush.msra.mxu0 0.0
  %456 = vmatpush.msra.mxu0 0.0
  %457 = vmatpush.msra.mxu0 0.0
  %458 = vmatpush.msra.mxu0 %v425
  %459 = vmatpush.msra.mxu0 %v424
  %460 = vmatmul.f32.gmra.mxu0 %v228
  %v461 = vpop.f32.mrf.mxu0
  %v462 = vadd.f32 0.0, %v461
  %463 = vmatmul.f32.gmra.mxu0 %v231
  %v464 = vpop.f32.mrf.mxu0
  %v465 = vadd.f32 0.0, %v464
  %466 = vmatmul.f32.gmra.mxu0 %v234
  %v467 = vpop.f32.mrf.mxu0
  %v468 = vadd.f32 0.0, %v467
  %469 = vmatmul.f32.gmra.mxu0 %v237
  %v470 = vpop.f32.mrf.mxu0
  %v471 = vadd.f32 0.0, %v470
  %472 = vmatmul.f32.gmra.mxu0 %v240
  %v473 = vpop.f32.mrf.mxu0
  %v474 = vadd.f32 0.0, %v473
  %475 = vmatmul.f32.gmra.mxu0 %v243
  %v476 = vpop.f32.mrf.mxu0
  %v477 = vadd.f32 0.0, %v476
  %478 = vmatmul.f32.gmra.mxu0 %v246
  %v479 = vpop.f32.mrf.mxu0
  %v480 = vadd.f32 0.0, %v479
  %481 = vmatmul.f32.gmra.mxu0 %v249
  %v482 = vpop.f32.mrf.mxu0
  %v483 = vadd.f32 0.0, %v482
  %484 = vdwg.mxu0
  %v485 = vadd.f32 %v436, %v462
  %v486 = vadd.f32 %v437, %v465
  %v487 = vadd.f32 %v438, %v468
  %v488 = vadd.f32 %v439, %v471
  %v489 = vadd.f32 %v440, %v474
  %v490 = vadd.f32 %v441, %v477
  %v491 = vadd.f32 %v442, %v480
  %v492 = vadd.f32 %v443, %v483
  %v493 = vsub.f32 0.0, %v485
  %v494 = vsub.f32 0.0, %v486
  %v495 = vmul.f32 %v493, 1.442695
  %v496 = vpow.pop %v495
  %v497 = vmul.f32 %v494, 1.442695
  %v498 = vpow.pop %v497
  %v499 = vadd.f32 %v496, 1.0
  %v500 = vadd.f32 %v498, 1.0
  %v501 = vrcp.pop %v499
  %v502 = vmul.f32 %v499, %v501
  %v503 = vsub.f32 1.0, %v502
  %v504 = vmul.f32 %v501, %v503
  %v505 = vadd.f32 %v501, %v504
  %vm506 = vweird.f32 %v499
  %vm507 = vweird.f32 %v501
  %vm508 = vmor %vm506, %vm507
  %v509 = vsel %vm508, %v501, %v505
  %v510 = vand.u32 2147483647, %v499
  %vm511 = vcmp.eq.f32.partialorder %v510, 8.507059e+37
  %v512 = vand.u32 %v499, 2147483648
  %v513 = vor.u32 1.1754944e-38, %v512
  %v514 = vsel %vm511, %v513, %v509
  %v515 = vmul.f32 1.0, %v514
  %v516 = vrcp.pop %v500
  %v517 = vmul.f32 %v500, %v516
  %v518 = vsub.f32 1.0, %v517
  %v519 = vmul.f32 %v516, %v518
  %v520 = vadd.f32 %v516, %v519
  %vm521 = vweird.f32 %v500
  %vm522 = vweird.f32 %v516
  %vm523 = vmor %vm521, %vm522
  %v524 = vsel %vm523, %v516, %v520
  %v525 = vand.u32 2147483647, %v500
  %vm526 = vcmp.eq.f32.partialorder %v525, 8.507059e+37
  %v527 = vand.u32 %v500, 2147483648
  %v528 = vor.u32 1.1754944e-38, %v527
  %v529 = vsel %vm526, %v528, %v524
  %v530 = vmul.f32 1.0, %v529
  %v531 = vsub.f32 0.0, %v487
  %v532 = vsub.f32 0.0, %v488
  %v533 = vmul.f32 %v531, 1.442695
  %v534 = vpow.pop %v533
  %v535 = vmul.f32 %v532, 1.442695
  %v536 = vpow.pop %v535
  %v537 = vadd.f32 %v534, 1.0
  %v538 = vadd.f32 %v536, 1.0
  %v539 = vrcp.pop %v537
  %v540 = vmul.f32 %v537, %v539
  %v541 = vsub.f32 1.0, %v540
  %v542 = vmul.f32 %v539, %v541
  %v543 = vadd.f32 %v539, %v542
  %vm544 = vweird.f32 %v537
  %vm545 = vweird.f32 %v539
  %vm546 = vmor %vm544, %vm545
  %v547 = vsel %vm546, %v539, %v543
  %v548 = vand.u32 2147483647, %v537
  %vm549 = vcmp.eq.f32.partialorder %v548, 8.507059e+37
  %v550 = vand.u32 %v537, 2147483648
  %v551 = vor.u32 1.1754944e-38, %v550
  %v552 = vsel %vm549, %v551, %v547
  %v553 = vmul.f32 1.0, %v552
  %v554 = vrcp.pop %v538
  %v555 = vmul.f32 %v538, %v554
  %v556 = vsub.f32 1.0, %v555
  %v557 = vmul.f32 %v554, %v556
  %v558 = vadd.f32 %v554, %v557
  %vm559 = vweird.f32 %v538
  %vm560 = vweird.f32 %v554
  %vm561 = vmor %vm559, %vm560
  %v562 = vsel %vm561, %v554, %v558
  %v563 = vand.u32 2147483647, %v538
  %vm564 = vcmp.eq.f32.partialorder %v563, 8.507059e+37
  %v565 = vand.u32 %v538, 2147483648
  %v566 = vor.u32 1.1754944e-38, %v565
  %v567 = vsel %vm564, %v566, %v562
  %v568 = vmul.f32 1.0, %v567
  %v569 = vtanh.pop %v489
  %v570 = vtanh.pop %v490
  %v571 = vsub.f32 0.0, %v491
  %v572 = vsub.f32 0.0, %v492
  %v573 = vmul.f32 %v571, 1.442695
  %v574 = vpow.pop %v573
  %v575 = vmul.f32 %v572, 1.442695
  %v576 = vpow.pop %v575
  %v577 = vadd.f32 %v574, 1.0
  %v578 = vadd.f32 %v576, 1.0
  %v579 = vrcp.pop %v577
  %v580 = vmul.f32 %v577, %v579
  %v581 = vsub.f32 1.0, %v580
  %v582 = vmul.f32 %v579, %v581
  %v583 = vadd.f32 %v579, %v582
  %vm584 = vweird.f32 %v577
  %vm585 = vweird.f32 %v579
  %vm586 = vmor %vm584, %vm585
  %v587 = vsel %vm586, %v579, %v583
  %v588 = vand.u32 2147483647, %v577
  %vm589 = vcmp.eq.f32.partialorder %v588, 8.507059e+37
  %v590 = vand.u32 %v577, 2147483648
  %v591 = vor.u32 1.1754944e-38, %v590
  %v592 = vsel %vm589, %v591, %v587
  %v593 = vmul.f32 1.0, %v592
  %v594 = vrcp.pop %v578
  %v595 = vmul.f32 %v578, %v594
  %v596 = vsub.f32 1.0, %v595
  %v597 = vmul.f32 %v594, %v596
  %v598 = vadd.f32 %v594, %v597
  %vm599 = vweird.f32 %v578
  %vm600 = vweird.f32 %v594
  %vm601 = vmor %vm599, %vm600
  %v602 = vsel %vm601, %v594, %v598
  %v603 = vand.u32 2147483647, %v578
  %vm604 = vcmp.eq.f32.partialorder %v603, 8.507059e+37
  %v605 = vand.u32 %v578, 2147483648
  %v606 = vor.u32 1.1754944e-38, %v605
  %v607 = vsel %vm604, %v606, %v602
  %v608 = vmul.f32 1.0, %v607
  %v609 = vmul.f32 %v553, %v420
  %v610 = vmul.f32 %v568, %v421
  %v611 = vmul.f32 %v515, %v569
  %v612 = vmul.f32 %v530, %v570
  %v613 = vadd.f32 %v609, %v611
  %v614 = vadd.f32 %v610, %v612
  %v615 = vtanh.pop %v613
  %v616 = vtanh.pop %v614
  %v617 = vmul.f32 %v593, %v615
  %v618 = vmul.f32 %v608, %v616
  %v619 = vld [vmem:[%s0 + $0x3] sm:$0x1]
  %v620 = vperm.slane %v619, 0
  %v621 = vmul.f32 %v14, %v620
  %v622 = vmul.f32 %v15, %v620
  %v623 = vmul.f32 %v16, %v620
  %v624 = vmul.f32 %v17, %v620
  %v625 = vmul.f32 %v18, %v620
  %v626 = vmul.f32 %v19, %v620
  %v627 = vmul.f32 %v20, %v620
  %v628 = vmul.f32 %v21, %v620
  %v629 = vadd.f32 %v621, %v22
  %v630 = vadd.f32 %v622, %v23
  %v631 = vadd.f32 %v623, %v24
  %v632 = vadd.f32 %v624, %v25
  %v633 = vadd.f32 %v625, %v26
  %v634 = vadd.f32 %v626, %v27
  %v635 = vadd.f32 %v627, %v28
  %v636 = vadd.f32 %v628, %v29
  %637 = vmatpush.msra.mxu0 0.0
  %638 = vmatpush.msra.mxu0 0.0
  %639 = vmatpush.msra.mxu0 0.0
  %640 = vmatpush.msra.mxu0 0.0
  %641 = vmatpush.msra.mxu0 0.0
  %642 = vmatpush.msra.mxu0 0.0
  %643 = vmatpush.msra.mxu0 0.0
  %644 = vmatpush.msra.mxu0 0.0
  %645 = vmatpush.msra.mxu0 0.0
  %646 = vmatpush.msra.mxu0 0.0
  %647 = vmatpush.msra.mxu0 0.0
  %648 = vmatpush.msra.mxu0 0.0
  %649 = vmatpush.msra.mxu0 0.0
  %650 = vmatpush.msra.mxu0 0.0
  %651 = vmatpush.msra.mxu0 %v618
  %652 = vmatpush.msra.mxu0 %v617
  %653 = vmatmul.f32.gmra.mxu0 %v228
  %v654 = vpop.f32.mrf.mxu0
  %v655 = vadd.f32 0.0, %v654
  %656 = vmatmul.f32.gmra.mxu0 %v231
  %v657 = vpop.f32.mrf.mxu0
  %v658 = vadd.f32 0.0, %v657
  %659 = vmatmul.f32.gmra.mxu0 %v234
  %v660 = vpop.f32.mrf.mxu0
  %v661 = vadd.f32 0.0, %v660
  %662 = vmatmul.f32.gmra.mxu0 %v237
  %v663 = vpop.f32.mrf.mxu0
  %v664 = vadd.f32 0.0, %v663
  %665 = vmatmul.f32.gmra.mxu0 %v240
  %v666 = vpop.f32.mrf.mxu0
  %v667 = vadd.f32 0.0, %v666
  %668 = vmatmul.f32.gmra.mxu0 %v243
  %v669 = vpop.f32.mrf.mxu0
  %v670 = vadd.f32 0.0, %v669
  %671 = vmatmul.f32.gmra.mxu0 %v246
  %v672 = vpop.f32.mrf.mxu0
  %v673 = vadd.f32 0.0, %v672
  %674 = vmatmul.f32.gmra.mxu0 %v249
  %v675 = vpop.f32.mrf.mxu0
  %v676 = vadd.f32 0.0, %v675
  %677 = vdwg.mxu0
  %v678 = vadd.f32 %v629, %v655
  %v679 = vadd.f32 %v630, %v658
  %v680 = vadd.f32 %v631, %v661
  %v681 = vadd.f32 %v632, %v664
  %v682 = vadd.f32 %v633, %v667
  %v683 = vadd.f32 %v634, %v670
  %v684 = vadd.f32 %v635, %v673
  %v685 = vadd.f32 %v636, %v676
  %v686 = vsub.f32 0.0, %v678
  %v687 = vsub.f32 0.0, %v679
  %v688 = vmul.f32 %v686, 1.442695
  %v689 = vpow.pop %v688
  %v690 = vmul.f32 %v687, 1.442695
  %v691 = vpow.pop %v690
  %v692 = vadd.f32 %v689, 1.0
  %v693 = vadd.f32 %v691, 1.0
  %v694 = vrcp.pop %v692
  %v695 = vmul.f32 %v692, %v694
  %v696 = vsub.f32 1.0, %v695
  %v697 = vmul.f32 %v694, %v696
  %v698 = vadd.f32 %v694, %v697
  %vm699 = vweird.f32 %v692
  %vm700 = vweird.f32 %v694
  %vm701 = vmor %vm699, %vm700
  %v702 = vsel %vm701, %v694, %v698
  %v703 = vand.u32 2147483647, %v692
  %vm704 = vcmp.eq.f32.partialorder %v703, 8.507059e+37
  %v705 = vand.u32 %v692, 2147483648
  %v706 = vor.u32 1.1754944e-38, %v705
  %v707 = vsel %vm704, %v706, %v702
  %v708 = vmul.f32 1.0, %v707
  %v709 = vrcp.pop %v693
  %v710 = vmul.f32 %v693, %v709
  %v711 = vsub.f32 1.0, %v710
  %v712 = vmul.f32 %v709, %v711
  %v713 = vadd.f32 %v709, %v712
  %vm714 = vweird.f32 %v693
  %vm715 = vweird.f32 %v709
  %vm716 = vmor %vm714, %vm715
  %v717 = vsel %vm716, %v709, %v713
  %v718 = vand.u32 2147483647, %v693
  %vm719 = vcmp.eq.f32.partialorder %v718, 8.507059e+37
  %v720 = vand.u32 %v693, 2147483648
  %v721 = vor.u32 1.1754944e-38, %v720
  %v722 = vsel %vm719, %v721, %v717
  %v723 = vmul.f32 1.0, %v722
  %v724 = vsub.f32 0.0, %v680
  %v725 = vsub.f32 0.0, %v681
  %v726 = vmul.f32 %v724, 1.442695
  %v727 = vpow.pop %v726
  %v728 = vmul.f32 %v725, 1.442695
  %v729 = vpow.pop %v728
  %v730 = vadd.f32 %v727, 1.0
  %v731 = vadd.f32 %v729, 1.0
  %v732 = vrcp.pop %v730
  %v733 = vmul.f32 %v730, %v732
  %v734 = vsub.f32 1.0, %v733
  %v735 = vmul.f32 %v732, %v734
  %v736 = vadd.f32 %v732, %v735
  %vm737 = vweird.f32 %v730
  %vm738 = vweird.f32 %v732
  %vm739 = vmor %vm737, %vm738
  %v740 = vsel %vm739, %v732, %v736
  %v741 = vand.u32 2147483647, %v730
  %vm742 = vcmp.eq.f32.partialorder %v741, 8.507059e+37
  %v743 = vand.u32 %v730, 2147483648
  %v744 = vor.u32 1.1754944e-38, %v743
  %v745 = vsel %vm742, %v744, %v740
  %v746 = vmul.f32 1.0, %v745
  %v747 = vrcp.pop %v731
  %v748 = vmul.f32 %v731, %v747
  %v749 = vsub.f32 1.0, %v748
  %v750 = vmul.f32 %v747, %v749
  %v751 = vadd.f32 %v747, %v750
  %vm752 = vweird.f32 %v731
  %vm753 = vweird.f32 %v747
  %vm754 = vmor %vm752, %vm753
  %v755 = vsel %vm754, %v747, %v751
  %v756 = vand.u32 2147483647, %v731
  %vm757 = vcmp.eq.f32.partialorder %v756, 8.507059e+37
  %v758 = vand.u32 %v731, 2147483648
  %v759 = vor.u32 1.1754944e-38, %v758
  %v760 = vsel %vm757, %v759, %v755
  %v761 = vmul.f32 1.0, %v760
  %v762 = vtanh.pop %v682
  %v763 = vtanh.pop %v683
  %v764 = vsub.f32 0.0, %v684
  %v765 = vsub.f32 0.0, %v685
  %v766 = vmul.f32 %v764, 1.442695
  %v767 = vpow.pop %v766
  %v768 = vmul.f32 %v765, 1.442695
  %v769 = vpow.pop %v768
  %v770 = vadd.f32 %v767, 1.0
  %v771 = vadd.f32 %v769, 1.0
  %v772 = vrcp.pop %v770
  %v773 = vmul.f32 %v770, %v772
  %v774 = vsub.f32 1.0, %v773
  %v775 = vmul.f32 %v772, %v774
  %v776 = vadd.f32 %v772, %v775
  %vm777 = vweird.f32 %v770
  %vm778 = vweird.f32 %v772
  %vm779 = vmor %vm777, %vm778
  %v780 = vsel %vm779, %v772, %v776
  %v781 = vand.u32 2147483647, %v770
  %vm782 = vcmp.eq.f32.partialorder %v781, 8.507059e+37
  %v783 = vand.u32 %v770, 2147483648
  %v784 = vor.u32 1.1754944e-38, %v783
  %v785 = vsel %vm782, %v784, %v780
  %v786 = vmul.f32 1.0, %v785
  %v787 = vrcp.pop %v771
  %v788 = vmul.f32 %v771, %v787
  %v789 = vsub.f32 1.0, %v788
  %v790 = vmul.f32 %v787, %v789
  %v791 = vadd.f32 %v787, %v790
  %vm792 = vweird.f32 %v771
  %vm793 = vweird.f32 %v787
  %vm794 = vmor %vm792, %vm793
  %v795 = vsel %vm794, %v787, %v791
  %v796 = vand.u32 2147483647, %v771
  %vm797 = vcmp.eq.f32.partialorder %v796, 8.507059e+37
  %v798 = vand.u32 %v771, 2147483648
  %v799 = vor.u32 1.1754944e-38, %v798
  %v800 = vsel %vm797, %v799, %v795
  %v801 = vmul.f32 1.0, %v800
  %v802 = vmul.f32 %v746, %v613
  %v803 = vmul.f32 %v761, %v614
  %v804 = vmul.f32 %v708, %v762
  %v805 = vmul.f32 %v723, %v763
  %v806 = vadd.f32 %v802, %v804
  %v807 = vadd.f32 %v803, %v805
  %v808 = vtanh.pop %v806
  %v809 = vtanh.pop %v807
  %v810 = vmul.f32 %v786, %v808
  %v811 = vmul.f32 %v801, %v809
  %v812 = vld [vmem:[%s0 + $0x4] sm:$0x1]
  %v813 = vperm.slane %v812, 0
  %v814 = vmul.f32 %v14, %v813
  %v815 = vmul.f32 %v15, %v813
  %v816 = vmul.f32 %v16, %v813
  %v817 = vmul.f32 %v17, %v813
  %v818 = vmul.f32 %v18, %v813
  %v819 = vmul.f32 %v19, %v813
  %v820 = vmul.f32 %v20, %v813
  %v821 = vmul.f32 %v21, %v813
  %v822 = vadd.f32 %v814, %v22
  %v823 = vadd.f32 %v815, %v23
  %v824 = vadd.f32 %v816, %v24
  %v825 = vadd.f32 %v817, %v25
  %v826 = vadd.f32 %v818, %v26
  %v827 = vadd.f32 %v819, %v27
  %v828 = vadd.f32 %v820, %v28
  %v829 = vadd.f32 %v821, %v29
  %830 = vmatpush.msra.mxu0 0.0
  %831 = vmatpush.msra.mxu0 0.0
  %832 = vmatpush.msra.mxu0 0.0
  %833 = vmatpush.msra.mxu0 0.0
  %834 = vmatpush.msra.mxu0 0.0
  %835 = vmatpush.msra.mxu0 0.0
  %836 = vmatpush.msra.mxu0 0.0
  %837 = vmatpush.msra.mxu0 0.0
  %838 = vmatpush.msra.mxu0 0.0
  %839 = vmatpush.msra.mxu0 0.0
  %840 = vmatpush.msra.mxu0 0.0
  %841 = vmatpush.msra.mxu0 0.0
  %842 = vmatpush.msra.mxu0 0.0
  %843 = vmatpush.msra.mxu0 0.0
  %844 = vmatpush.msra.mxu0 %v811
  %845 = vmatpush.msra.mxu0 %v810
  %846 = vmatmul.f32.gmra.mxu0 %v228
  %v847 = vpop.f32.mrf.mxu0
  %v848 = vadd.f32 0.0, %v847
  %849 = vmatmul.f32.gmra.mxu0 %v231
  %v850 = vpop.f32.mrf.mxu0
  %v851 = vadd.f32 0.0, %v850
  %852 = vmatmul.f32.gmra.mxu0 %v234
  %v853 = vpop.f32.mrf.mxu0
  %v854 = vadd.f32 0.0, %v853
  %855 = vmatmul.f32.gmra.mxu0 %v237
  %v856 = vpop.f32.mrf.mxu0
  %v857 = vadd.f32 0.0, %v856
  %858 = vmatmul.f32.gmra.mxu0 %v240
  %v859 = vpop.f32.mrf.mxu0
  %v860 = vadd.f32 0.0, %v859
  %861 = vmatmul.f32.gmra.mxu0 %v243
  %v862 = vpop.f32.mrf.mxu0
  %v863 = vadd.f32 0.0, %v862
  %864 = vmatmul.f32.gmra.mxu0 %v246
  %v865 = vpop.f32.mrf.mxu0
  %v866 = vadd.f32 0.0, %v865
  %867 = vmatmul.f32.gmra.mxu0 %v249
  %v868 = vpop.f32.mrf.mxu0
  %v869 = vadd.f32 0.0, %v868
  %870 = vdwg.mxu0
  %v871 = vadd.f32 %v822, %v848
  %v872 = vadd.f32 %v823, %v851
  %v873 = vadd.f32 %v824, %v854
  %v874 = vadd.f32 %v825, %v857
  %v875 = vadd.f32 %v826, %v860
  %v876 = vadd.f32 %v827, %v863
  %v877 = vadd.f32 %v828, %v866
  %v878 = vadd.f32 %v829, %v869
  %v879 = vsub.f32 0.0, %v871
  %v880 = vsub.f32 0.0, %v872
  %v881 = vmul.f32 %v879, 1.442695
  %v882 = vpow.pop %v881
  %v883 = vmul.f32 %v880, 1.442695
  %v884 = vpow.pop %v883
  %v885 = vadd.f32 %v882, 1.0
  %v886 = vadd.f32 %v884, 1.0
  %v887 = vrcp.pop %v885
  %v888 = vmul.f32 %v885, %v887
  %v889 = vsub.f32 1.0, %v888
  %v890 = vmul.f32 %v887, %v889
  %v891 = vadd.f32 %v887, %v890
  %vm892 = vweird.f32 %v885
  %vm893 = vweird.f32 %v887
  %vm894 = vmor %vm892, %vm893
  %v895 = vsel %vm894, %v887, %v891
  %v896 = vand.u32 2147483647, %v885
  %vm897 = vcmp.eq.f32.partialorder %v896, 8.507059e+37
  %v898 = vand.u32 %v885, 2147483648
  %v899 = vor.u32 1.1754944e-38, %v898
  %v900 = vsel %vm897, %v899, %v895
  %v901 = vmul.f32 1.0, %v900
  %v902 = vrcp.pop %v886
  %v903 = vmul.f32 %v886, %v902
  %v904 = vsub.f32 1.0, %v903
  %v905 = vmul.f32 %v902, %v904
  %v906 = vadd.f32 %v902, %v905
  %vm907 = vweird.f32 %v886
  %vm908 = vweird.f32 %v902
  %vm909 = vmor %vm907, %vm908
  %v910 = vsel %vm909, %v902, %v906
  %v911 = vand.u32 2147483647, %v886
  %vm912 = vcmp.eq.f32.partialorder %v911, 8.507059e+37
  %v913 = vand.u32 %v886, 2147483648
  %v914 = vor.u32 1.1754944e-38, %v913
  %v915 = vsel %vm912, %v914, %v910
  %v916 = vmul.f32 1.0, %v915
  %v917 = vsub.f32 0.0, %v873
  %v918 = vsub.f32 0.0, %v874
  %v919 = vmul.f32 %v917, 1.442695
  %v920 = vpow.pop %v919
  %v921 = vmul.f32 %v918, 1.442695
  %v922 = vpow.pop %v921
  %v923 = vadd.f32 %v920, 1.0
  %v924 = vadd.f32 %v922, 1.0
  %v925 = vrcp.pop %v923
  %v926 = vmul.f32 %v923, %v925
  %v927 = vsub.f32 1.0, %v926
  %v928 = vmul.f32 %v925, %v927
  %v929 = vadd.f32 %v925, %v928
  %vm930 = vweird.f32 %v923
  %vm931 = vweird.f32 %v925
  %vm932 = vmor %vm930, %vm931
  %v933 = vsel %vm932, %v925, %v929
  %v934 = vand.u32 2147483647, %v923
  %vm935 = vcmp.eq.f32.partialorder %v934, 8.507059e+37
  %v936 = vand.u32 %v923, 2147483648
  %v937 = vor.u32 1.1754944e-38, %v936
  %v938 = vsel %vm935, %v937, %v933
  %v939 = vmul.f32 1.0, %v938
  %v940 = vrcp.pop %v924
  %v941 = vmul.f32 %v924, %v940
  %v942 = vsub.f32 1.0, %v941
  %v943 = vmul.f32 %v940, %v942
  %v944 = vadd.f32 %v940, %v943
  %vm945 = vweird.f32 %v924
  %vm946 = vweird.f32 %v940
  %vm947 = vmor %vm945, %vm946
  %v948 = vsel %vm947, %v940, %v944
  %v949 = vand.u32 2147483647, %v924
  %vm950 = vcmp.eq.f32.partialorder %v949, 8.507059e+37
  %v951 = vand.u32 %v924, 2147483648
  %v952 = vor.u32 1.1754944e-38, %v951
  %v953 = vsel %vm950, %v952, %v948
  %v954 = vmul.f32 1.0, %v953
  %v955 = vtanh.pop %v875
  %v956 = vtanh.pop %v876
  %v957 = vsub.f32 0.0, %v877
  %v958 = vsub.f32 0.0, %v878
  %v959 = vmul.f32 %v957, 1.442695
  %v960 = vpow.pop %v959
  %v961 = vmul.f32 %v958, 1.442695
  %v962 = vpow.pop %v961
  %v963 = vadd.f32 %v960, 1.0
  %v964 = vadd.f32 %v962, 1.0
  %v965 = vrcp.pop %v963
  %v966 = vmul.f32 %v963, %v965
  %v967 = vsub.f32 1.0, %v966
  %v968 = vmul.f32 %v965, %v967
  %v969 = vadd.f32 %v965, %v968
  %vm970 = vweird.f32 %v963
  %vm971 = vweird.f32 %v965
  %vm972 = vmor %vm970, %vm971
  %v973 = vsel %vm972, %v965, %v969
  %v974 = vand.u32 2147483647, %v963
  %vm975 = vcmp.eq.f32.partialorder %v974, 8.507059e+37
  %v976 = vand.u32 %v963, 2147483648
  %v977 = vor.u32 1.1754944e-38, %v976
  %v978 = vsel %vm975, %v977, %v973
  %v979 = vmul.f32 1.0, %v978
  %v980 = vrcp.pop %v964
  %v981 = vmul.f32 %v964, %v980
  %v982 = vsub.f32 1.0, %v981
  %v983 = vmul.f32 %v980, %v982
  %v984 = vadd.f32 %v980, %v983
  %vm985 = vweird.f32 %v964
  %vm986 = vweird.f32 %v980
  %vm987 = vmor %vm985, %vm986
  %v988 = vsel %vm987, %v980, %v984
  %v989 = vand.u32 2147483647, %v964
  %vm990 = vcmp.eq.f32.partialorder %v989, 8.507059e+37
  %v991 = vand.u32 %v964, 2147483648
  %v992 = vor.u32 1.1754944e-38, %v991
  %v993 = vsel %vm990, %v992, %v988
  %v994 = vmul.f32 1.0, %v993
  %v995 = vmul.f32 %v939, %v806
  %v996 = vmul.f32 %v954, %v807
  %v997 = vmul.f32 %v901, %v955
  %v998 = vmul.f32 %v916, %v956
  %v999 = vadd.f32 %v995, %v997
  %v1000 = vadd.f32 %v996, %v998
  %v1001 = vtanh.pop %v999
  %v1002 = vtanh.pop %v1000
  %v1003 = vmul.f32 %v979, %v1001
  %v1004 = vmul.f32 %v994, %v1002
  %v1005 = vld [vmem:[%s0 + $0x5] sm:$0x1]
  %v1006 = vperm.slane %v1005, 0
  %v1007 = vmul.f32 %v14, %v1006
  %v1008 = vmul.f32 %v15, %v1006
  %v1009 = vmul.f32 %v16, %v1006
  %v1010 = vmul.f32 %v17, %v1006
  %v1011 = vmul.f32 %v18, %v1006
  %v1012 = vmul.f32 %v19, %v1006
  %v1013 = vmul.f32 %v20, %v1006
  %v1014 = vmul.f32 %v21, %v1006
  %v1015 = vadd.f32 %v1007, %v22
  %v1016 = vadd.f32 %v1008, %v23
  %v1017 = vadd.f32 %v1009, %v24
  %v1018 = vadd.f32 %v1010, %v25
  %v1019 = vadd.f32 %v1011, %v26
  %v1020 = vadd.f32 %v1012, %v27
  %v1021 = vadd.f32 %v1013, %v28
  %v1022 = vadd.f32 %v1014, %v29
  %1023 = vmatpush.msra.mxu0 0.0
  %1024 = vmatpush.msra.mxu0 0.0
  %1025 = vmatpush.msra.mxu0 0.0
  %1026 = vmatpush.msra.mxu0 0.0
  %1027 = vmatpush.msra.mxu0 0.0
  %1028 = vmatpush.msra.mxu0 0.0
  %1029 = vmatpush.msra.mxu0 0.0
  %1030 = vmatpush.msra.mxu0 0.0
  %1031 = vmatpush.msra.mxu0 0.0
  %1032 = vmatpush.msra.mxu0 0.0
  %1033 = vmatpush.msra.mxu0 0.0
  %1034 = vmatpush.msra.mxu0 0.0
  %1035 = vmatpush.msra.mxu0 0.0
  %1036 = vmatpush.msra.mxu0 0.0
  %1037 = vmatpush.msra.mxu0 %v1004
  %1038 = vmatpush.msra.mxu0 %v1003
  %1039 = vmatmul.f32.gmra.mxu0 %v228
  %v1040 = vpop.f32.mrf.mxu0
  %v1041 = vadd.f32 0.0, %v1040
  %1042 = vmatmul.f32.gmra.mxu0 %v231
  %v1043 = vpop.f32.mrf.mxu0
  %v1044 = vadd.f32 0.0, %v1043
  %1045 = vmatmul.f32.gmra.mxu0 %v234
  %v1046 = vpop.f32.mrf.mxu0
  %v1047 = vadd.f32 0.0, %v1046
  %1048 = vmatmul.f32.gmra.mxu0 %v237
  %v1049 = vpop.f32.mrf.mxu0
  %v1050 = vadd.f32 0.0, %v1049
  %1051 = vmatmul.f32.gmra.mxu0 %v240
  %v1052 = vpop.f32.mrf.mxu0
  %v1053 = vadd.f32 0.0, %v1052
  %1054 = vmatmul.f32.gmra.mxu0 %v243
  %v1055 = vpop.f32.mrf.mxu0
  %v1056 = vadd.f32 0.0, %v1055
  %1057 = vmatmul.f32.gmra.mxu0 %v246
  %v1058 = vpop.f32.mrf.mxu0
  %v1059 = vadd.f32 0.0, %v1058
  %1060 = vmatmul.f32.gmra.mxu0 %v249
  %v1061 = vpop.f32.mrf.mxu0
  %v1062 = vadd.f32 0.0, %v1061
  %1063 = vdwg.mxu0
  %v1064 = vadd.f32 %v1015, %v1041
  %v1065 = vadd.f32 %v1016, %v1044
  %v1066 = vadd.f32 %v1017, %v1047
  %v1067 = vadd.f32 %v1018, %v1050
  %v1068 = vadd.f32 %v1019, %v1053
  %v1069 = vadd.f32 %v1020, %v1056
  %v1070 = vadd.f32 %v1021, %v1059
  %v1071 = vadd.f32 %v1022, %v1062
  %v1072 = vsub.f32 0.0, %v1064
  %v1073 = vsub.f32 0.0, %v1065
  %v1074 = vmul.f32 %v1072, 1.442695
  %v1075 = vpow.pop %v1074
  %v1076 = vmul.f32 %v1073, 1.442695
  %v1077 = vpow.pop %v1076
  %v1078 = vadd.f32 %v1075, 1.0
  %v1079 = vadd.f32 %v1077, 1.0
  %v1080 = vrcp.pop %v1078
  %v1081 = vmul.f32 %v1078, %v1080
  %v1082 = vsub.f32 1.0, %v1081
  %v1083 = vmul.f32 %v1080, %v1082
  %v1084 = vadd.f32 %v1080, %v1083
  %vm1085 = vweird.f32 %v1078
  %vm1086 = vweird.f32 %v1080
  %vm1087 = vmor %vm1085, %vm1086
  %v1088 = vsel %vm1087, %v1080, %v1084
  %v1089 = vand.u32 2147483647, %v1078
  %vm1090 = vcmp.eq.f32.partialorder %v1089, 8.507059e+37
  %v1091 = vand.u32 %v1078, 2147483648
  %v1092 = vor.u32 1.1754944e-38, %v1091
  %v1093 = vsel %vm1090, %v1092, %v1088
  %v1094 = vmul.f32 1.0, %v1093
  %v1095 = vrcp.pop %v1079
  %v1096 = vmul.f32 %v1079, %v1095
  %v1097 = vsub.f32 1.0, %v1096
  %v1098 = vmul.f32 %v1095, %v1097
  %v1099 = vadd.f32 %v1095, %v1098
  %vm1100 = vweird.f32 %v1079
  %vm1101 = vweird.f32 %v1095
  %vm1102 = vmor %vm1100, %vm1101
  %v1103 = vsel %vm1102, %v1095, %v1099
  %v1104 = vand.u32 2147483647, %v1079
  %vm1105 = vcmp.eq.f32.partialorder %v1104, 8.507059e+37
  %v1106 = vand.u32 %v1079, 2147483648
  %v1107 = vor.u32 1.1754944e-38, %v1106
  %v1108 = vsel %vm1105, %v1107, %v1103
  %v1109 = vmul.f32 1.0, %v1108
  %v1110 = vsub.f32 0.0, %v1066
  %v1111 = vsub.f32 0.0, %v1067
  %v1112 = vmul.f32 %v1110, 1.442695
  %v1113 = vpow.pop %v1112
  %v1114 = vmul.f32 %v1111, 1.442695
  %v1115 = vpow.pop %v1114
  %v1116 = vadd.f32 %v1113, 1.0
  %v1117 = vadd.f32 %v1115, 1.0
  %v1118 = vrcp.pop %v1116
  %v1119 = vmul.f32 %v1116, %v1118
  %v1120 = vsub.f32 1.0, %v1119
  %v1121 = vmul.f32 %v1118, %v1120
  %v1122 = vadd.f32 %v1118, %v1121
  %vm1123 = vweird.f32 %v1116
  %vm1124 = vweird.f32 %v1118
  %vm1125 = vmor %vm1123, %vm1124
  %v1126 = vsel %vm1125, %v1118, %v1122
  %v1127 = vand.u32 2147483647, %v1116
  %vm1128 = vcmp.eq.f32.partialorder %v1127, 8.507059e+37
  %v1129 = vand.u32 %v1116, 2147483648
  %v1130 = vor.u32 1.1754944e-38, %v1129
  %v1131 = vsel %vm1128, %v1130, %v1126
  %v1132 = vmul.f32 1.0, %v1131
  %v1133 = vrcp.pop %v1117
  %v1134 = vmul.f32 %v1117, %v1133
  %v1135 = vsub.f32 1.0, %v1134
  %v1136 = vmul.f32 %v1133, %v1135
  %v1137 = vadd.f32 %v1133, %v1136
  %vm1138 = vweird.f32 %v1117
  %vm1139 = vweird.f32 %v1133
  %vm1140 = vmor %vm1138, %vm1139
  %v1141 = vsel %vm1140, %v1133, %v1137
  %v1142 = vand.u32 2147483647, %v1117
  %vm1143 = vcmp.eq.f32.partialorder %v1142, 8.507059e+37
  %v1144 = vand.u32 %v1117, 2147483648
  %v1145 = vor.u32 1.1754944e-38, %v1144
  %v1146 = vsel %vm1143, %v1145, %v1141
  %v1147 = vmul.f32 1.0, %v1146
  %v1148 = vtanh.pop %v1068
  %v1149 = vtanh.pop %v1069
  %v1150 = vsub.f32 0.0, %v1070
  %v1151 = vsub.f32 0.0, %v1071
  %v1152 = vmul.f32 %v1150, 1.442695
  %v1153 = vpow.pop %v1152
  %v1154 = vmul.f32 %v1151, 1.442695
  %v1155 = vpow.pop %v1154
  %v1156 = vadd.f32 %v1153, 1.0
  %v1157 = vadd.f32 %v1155, 1.0
  %v1158 = vrcp.pop %v1156
  %v1159 = vmul.f32 %v1156, %v1158
  %v1160 = vsub.f32 1.0, %v1159
  %v1161 = vmul.f32 %v1158, %v1160
  %v1162 = vadd.f32 %v1158, %v1161
  %vm1163 = vweird.f32 %v1156
  %vm1164 = vweird.f32 %v1158
  %vm1165 = vmor %vm1163, %vm1164
  %v1166 = vsel %vm1165, %v1158, %v1162
  %v1167 = vand.u32 2147483647, %v1156
  %vm1168 = vcmp.eq.f32.partialorder %v1167, 8.507059e+37
  %v1169 = vand.u32 %v1156, 2147483648
  %v1170 = vor.u32 1.1754944e-38, %v1169
  %v1171 = vsel %vm1168, %v1170, %v1166
  %v1172 = vmul.f32 1.0, %v1171
  %v1173 = vrcp.pop %v1157
  %v1174 = vmul.f32 %v1157, %v1173
  %v1175 = vsub.f32 1.0, %v1174
  %v1176 = vmul.f32 %v1173, %v1175
  %v1177 = vadd.f32 %v1173, %v1176
  %vm1178 = vweird.f32 %v1157
  %vm1179 = vweird.f32 %v1173
  %vm1180 = vmor %vm1178, %vm1179
  %v1181 = vsel %vm1180, %v1173, %v1177
  %v1182 = vand.u32 2147483647, %v1157
  %vm1183 = vcmp.eq.f32.partialorder %v1182, 8.507059e+37
  %v1184 = vand.u32 %v1157, 2147483648
  %v1185 = vor.u32 1.1754944e-38, %v1184
  %v1186 = vsel %vm1183, %v1185, %v1181
  %v1187 = vmul.f32 1.0, %v1186
  %v1188 = vmul.f32 %v1132, %v999
  %v1189 = vmul.f32 %v1147, %v1000
  %v1190 = vmul.f32 %v1094, %v1148
  %v1191 = vmul.f32 %v1109, %v1149
  %v1192 = vadd.f32 %v1188, %v1190
  %v1193 = vadd.f32 %v1189, %v1191
  %v1194 = vtanh.pop %v1192
  %v1195 = vtanh.pop %v1193
  %v1196 = vmul.f32 %v1172, %v1194
  %v1197 = vmul.f32 %v1187, %v1195
  %v1198 = vld [vmem:[%s0 + $0x6] sm:$0x1]
  %v1199 = vperm.slane %v1198, 0
  %v1200 = vmul.f32 %v14, %v1199
  %v1201 = vmul.f32 %v15, %v1199
  %v1202 = vmul.f32 %v16, %v1199
  %v1203 = vmul.f32 %v17, %v1199
  %v1204 = vmul.f32 %v18, %v1199
  %v1205 = vmul.f32 %v19, %v1199
  %v1206 = vmul.f32 %v20, %v1199
  %v1207 = vmul.f32 %v21, %v1199
  %v1208 = vadd.f32 %v1200, %v22
  %v1209 = vadd.f32 %v1201, %v23
  %v1210 = vadd.f32 %v1202, %v24
  %v1211 = vadd.f32 %v1203, %v25
  %v1212 = vadd.f32 %v1204, %v26
  %v1213 = vadd.f32 %v1205, %v27
  %v1214 = vadd.f32 %v1206, %v28
  %v1215 = vadd.f32 %v1207, %v29
  %1216 = vmatpush.msra.mxu0 0.0
  %1217 = vmatpush.msra.mxu0 0.0
  %1218 = vmatpush.msra.mxu0 0.0
  %1219 = vmatpush.msra.mxu0 0.0
  %1220 = vmatpush.msra.mxu0 0.0
  %1221 = vmatpush.msra.mxu0 0.0
  %1222 = vmatpush.msra.mxu0 0.0
  %1223 = vmatpush.msra.mxu0 0.0
  %1224 = vmatpush.msra.mxu0 0.0
  %1225 = vmatpush.msra.mxu0 0.0
  %1226 = vmatpush.msra.mxu0 0.0
  %1227 = vmatpush.msra.mxu0 0.0
  %1228 = vmatpush.msra.mxu0 0.0
  %1229 = vmatpush.msra.mxu0 0.0
  %1230 = vmatpush.msra.mxu0 %v1197
  %1231 = vmatpush.msra.mxu0 %v1196
  %1232 = vmatmul.f32.gmra.mxu0 %v228
  %v1233 = vpop.f32.mrf.mxu0
  %v1234 = vadd.f32 0.0, %v1233
  %1235 = vmatmul.f32.gmra.mxu0 %v231
  %v1236 = vpop.f32.mrf.mxu0
  %v1237 = vadd.f32 0.0, %v1236
  %1238 = vmatmul.f32.gmra.mxu0 %v234
  %v1239 = vpop.f32.mrf.mxu0
  %v1240 = vadd.f32 0.0, %v1239
  %1241 = vmatmul.f32.gmra.mxu0 %v237
  %v1242 = vpop.f32.mrf.mxu0
  %v1243 = vadd.f32 0.0, %v1242
  %1244 = vmatmul.f32.gmra.mxu0 %v240
  %v1245 = vpop.f32.mrf.mxu0
  %v1246 = vadd.f32 0.0, %v1245
  %1247 = vmatmul.f32.gmra.mxu0 %v243
  %v1248 = vpop.f32.mrf.mxu0
  %v1249 = vadd.f32 0.0, %v1248
  %1250 = vmatmul.f32.gmra.mxu0 %v246
  %v1251 = vpop.f32.mrf.mxu0
  %v1252 = vadd.f32 0.0, %v1251
  %1253 = vmatmul.f32.gmra.mxu0 %v249
  %v1254 = vpop.f32.mrf.mxu0
  %v1255 = vadd.f32 0.0, %v1254
  %1256 = vdwg.mxu0
  %v1257 = vadd.f32 %v1208, %v1234
  %v1258 = vadd.f32 %v1209, %v1237
  %v1259 = vadd.f32 %v1210, %v1240
  %v1260 = vadd.f32 %v1211, %v1243
  %v1261 = vadd.f32 %v1212, %v1246
  %v1262 = vadd.f32 %v1213, %v1249
  %v1263 = vadd.f32 %v1214, %v1252
  %v1264 = vadd.f32 %v1215, %v1255
  %v1265 = vsub.f32 0.0, %v1257
  %v1266 = vsub.f32 0.0, %v1258
  %v1267 = vmul.f32 %v1265, 1.442695
  %v1268 = vpow.pop %v1267
  %v1269 = vmul.f32 %v1266, 1.442695
  %v1270 = vpow.pop %v1269
  %v1271 = vadd.f32 %v1268, 1.0
  %v1272 = vadd.f32 %v1270, 1.0
  %v1273 = vrcp.pop %v1271
  %v1274 = vmul.f32 %v1271, %v1273
  %v1275 = vsub.f32 1.0, %v1274
  %v1276 = vmul.f32 %v1273, %v1275
  %v1277 = vadd.f32 %v1273, %v1276
  %vm1278 = vweird.f32 %v1271
  %vm1279 = vweird.f32 %v1273
  %vm1280 = vmor %vm1278, %vm1279
  %v1281 = vsel %vm1280, %v1273, %v1277
  %v1282 = vand.u32 2147483647, %v1271
  %vm1283 = vcmp.eq.f32.partialorder %v1282, 8.507059e+37
  %v1284 = vand.u32 %v1271, 2147483648
  %v1285 = vor.u32 1.1754944e-38, %v1284
  %v1286 = vsel %vm1283, %v1285, %v1281
  %v1287 = vmul.f32 1.0, %v1286
  %v1288 = vrcp.pop %v1272
  %v1289 = vmul.f32 %v1272, %v1288
  %v1290 = vsub.f32 1.0, %v1289
  %v1291 = vmul.f32 %v1288, %v1290
  %v1292 = vadd.f32 %v1288, %v1291
  %vm1293 = vweird.f32 %v1272
  %vm1294 = vweird.f32 %v1288
  %vm1295 = vmor %vm1293, %vm1294
  %v1296 = vsel %vm1295, %v1288, %v1292
  %v1297 = vand.u32 2147483647, %v1272
  %vm1298 = vcmp.eq.f32.partialorder %v1297, 8.507059e+37
  %v1299 = vand.u32 %v1272, 2147483648
  %v1300 = vor.u32 1.1754944e-38, %v1299
  %v1301 = vsel %vm1298, %v1300, %v1296
  %v1302 = vmul.f32 1.0, %v1301
  %v1303 = vsub.f32 0.0, %v1259
  %v1304 = vsub.f32 0.0, %v1260
  %v1305 = vmul.f32 %v1303, 1.442695
  %v1306 = vpow.pop %v1305
  %v1307 = vmul.f32 %v1304, 1.442695
  %v1308 = vpow.pop %v1307
  %v1309 = vadd.f32 %v1306, 1.0
  %v1310 = vadd.f32 %v1308, 1.0
  %v1311 = vrcp.pop %v1309
  %v1312 = vmul.f32 %v1309, %v1311
  %v1313 = vsub.f32 1.0, %v1312
  %v1314 = vmul.f32 %v1311, %v1313
  %v1315 = vadd.f32 %v1311, %v1314
  %vm1316 = vweird.f32 %v1309
  %vm1317 = vweird.f32 %v1311
  %vm1318 = vmor %vm1316, %vm1317
  %v1319 = vsel %vm1318, %v1311, %v1315
  %v1320 = vand.u32 2147483647, %v1309
  %vm1321 = vcmp.eq.f32.partialorder %v1320, 8.507059e+37
  %v1322 = vand.u32 %v1309, 2147483648
  %v1323 = vor.u32 1.1754944e-38, %v1322
  %v1324 = vsel %vm1321, %v1323, %v1319
  %v1325 = vmul.f32 1.0, %v1324
  %v1326 = vrcp.pop %v1310
  %v1327 = vmul.f32 %v1310, %v1326
  %v1328 = vsub.f32 1.0, %v1327
  %v1329 = vmul.f32 %v1326, %v1328
  %v1330 = vadd.f32 %v1326, %v1329
  %vm1331 = vweird.f32 %v1310
  %vm1332 = vweird.f32 %v1326
  %vm1333 = vmor %vm1331, %vm1332
  %v1334 = vsel %vm1333, %v1326, %v1330
  %v1335 = vand.u32 2147483647, %v1310
  %vm1336 = vcmp.eq.f32.partialorder %v1335, 8.507059e+37
  %v1337 = vand.u32 %v1310, 2147483648
  %v1338 = vor.u32 1.1754944e-38, %v1337
  %v1339 = vsel %vm1336, %v1338, %v1334
  %v1340 = vmul.f32 1.0, %v1339
  %v1341 = vtanh.pop %v1261
  %v1342 = vtanh.pop %v1262
  %v1343 = vsub.f32 0.0, %v1263
  %v1344 = vsub.f32 0.0, %v1264
  %v1345 = vmul.f32 %v1343, 1.442695
  %v1346 = vpow.pop %v1345
  %v1347 = vmul.f32 %v1344, 1.442695
  %v1348 = vpow.pop %v1347
  %v1349 = vadd.f32 %v1346, 1.0
  %v1350 = vadd.f32 %v1348, 1.0
  %v1351 = vrcp.pop %v1349
  %v1352 = vmul.f32 %v1349, %v1351
  %v1353 = vsub.f32 1.0, %v1352
  %v1354 = vmul.f32 %v1351, %v1353
  %v1355 = vadd.f32 %v1351, %v1354
  %vm1356 = vweird.f32 %v1349
  %vm1357 = vweird.f32 %v1351
  %vm1358 = vmor %vm1356, %vm1357
  %v1359 = vsel %vm1358, %v1351, %v1355
  %v1360 = vand.u32 2147483647, %v1349
  %vm1361 = vcmp.eq.f32.partialorder %v1360, 8.507059e+37
  %v1362 = vand.u32 %v1349, 2147483648
  %v1363 = vor.u32 1.1754944e-38, %v1362
  %v1364 = vsel %vm1361, %v1363, %v1359
  %v1365 = vmul.f32 1.0, %v1364
  %v1366 = vrcp.pop %v1350
  %v1367 = vmul.f32 %v1350, %v1366
  %v1368 = vsub.f32 1.0, %v1367
  %v1369 = vmul.f32 %v1366, %v1368
  %v1370 = vadd.f32 %v1366, %v1369
  %vm1371 = vweird.f32 %v1350
  %vm1372 = vweird.f32 %v1366
  %vm1373 = vmor %vm1371, %vm1372
  %v1374 = vsel %vm1373, %v1366, %v1370
  %v1375 = vand.u32 2147483647, %v1350
  %vm1376 = vcmp.eq.f32.partialorder %v1375, 8.507059e+37
  %v1377 = vand.u32 %v1350, 2147483648
  %v1378 = vor.u32 1.1754944e-38, %v1377
  %v1379 = vsel %vm1376, %v1378, %v1374
  %v1380 = vmul.f32 1.0, %v1379
  %v1381 = vmul.f32 %v1325, %v1192
  %v1382 = vmul.f32 %v1340, %v1193
  %v1383 = vmul.f32 %v1287, %v1341
  %v1384 = vmul.f32 %v1302, %v1342
  %v1385 = vadd.f32 %v1381, %v1383
  %v1386 = vadd.f32 %v1382, %v1384
  %v1387 = vtanh.pop %v1385
  %v1388 = vtanh.pop %v1386
  %v1389 = vmul.f32 %v1365, %v1387
  %v1390 = vmul.f32 %v1380, %v1388
  %v1391 = vld [vmem:[%s0 + $0x7] sm:$0x1]
  %v1392 = vperm.slane %v1391, 0
  %v1393 = vmul.f32 %v14, %v1392
  %v1394 = vmul.f32 %v15, %v1392
  %v1395 = vmul.f32 %v16, %v1392
  %v1396 = vmul.f32 %v17, %v1392
  %v1397 = vmul.f32 %v18, %v1392
  %v1398 = vmul.f32 %v19, %v1392
  %v1399 = vmul.f32 %v20, %v1392
  %v1400 = vmul.f32 %v21, %v1392
  %v1401 = vadd.f32 %v1393, %v22
  %v1402 = vadd.f32 %v1394, %v23
  %v1403 = vadd.f32 %v1395, %v24
  %v1404 = vadd.f32 %v1396, %v25
  %v1405 = vadd.f32 %v1397, %v26
  %v1406 = vadd.f32 %v1398, %v27
  %v1407 = vadd.f32 %v1399, %v28
  %v1408 = vadd.f32 %v1400, %v29
  %1409 = vmatpush.msra.mxu0 0.0
  %1410 = vmatpush.msra.mxu0 0.0
  %1411 = vmatpush.msra.mxu0 0.0
  %1412 = vmatpush.msra.mxu0 0.0
  %1413 = vmatpush.msra.mxu0 0.0
  %1414 = vmatpush.msra.mxu0 0.0
  %1415 = vmatpush.msra.mxu0 0.0
  %1416 = vmatpush.msra.mxu0 0.0
  %1417 = vmatpush.msra.mxu0 0.0
  %1418 = vmatpush.msra.mxu0 0.0
  %1419 = vmatpush.msra.mxu0 0.0
  %1420 = vmatpush.msra.mxu0 0.0
  %1421 = vmatpush.msra.mxu0 0.0
  %1422 = vmatpush.msra.mxu0 0.0
  %1423 = vmatpush.msra.mxu0 %v1390
  %1424 = vmatpush.msra.mxu0 %v1389
  %1425 = vmatmul.f32.gmra.mxu0 %v228
  %v1426 = vpop.f32.mrf.mxu0
  %v1427 = vadd.f32 0.0, %v1426
  %1428 = vmatmul.f32.gmra.mxu0 %v231
  %v1429 = vpop.f32.mrf.mxu0
  %v1430 = vadd.f32 0.0, %v1429
  %1431 = vmatmul.f32.gmra.mxu0 %v234
  %v1432 = vpop.f32.mrf.mxu0
  %v1433 = vadd.f32 0.0, %v1432
  %1434 = vmatmul.f32.gmra.mxu0 %v237
  %v1435 = vpop.f32.mrf.mxu0
  %v1436 = vadd.f32 0.0, %v1435
  %1437 = vmatmul.f32.gmra.mxu0 %v240
  %v1438 = vpop.f32.mrf.mxu0
  %v1439 = vadd.f32 0.0, %v1438
  %1440 = vmatmul.f32.gmra.mxu0 %v243
  %v1441 = vpop.f32.mrf.mxu0
  %v1442 = vadd.f32 0.0, %v1441
  %1443 = vmatmul.f32.gmra.mxu0 %v246
  %v1444 = vpop.f32.mrf.mxu0
  %v1445 = vadd.f32 0.0, %v1444
  %1446 = vmatmul.f32.gmra.mxu0 %v249
  %v1447 = vpop.f32.mrf.mxu0
  %v1448 = vadd.f32 0.0, %v1447
  %1449 = vdwg.mxu0
  %v1450 = vadd.f32 %v1401, %v1427
  %v1451 = vadd.f32 %v1402, %v1430
  %v1452 = vadd.f32 %v1403, %v1433
  %v1453 = vadd.f32 %v1404, %v1436
  %v1454 = vadd.f32 %v1405, %v1439
  %v1455 = vadd.f32 %v1406, %v1442
  %v1456 = vadd.f32 %v1407, %v1445
  %v1457 = vadd.f32 %v1408, %v1448
  %v1458 = vsub.f32 0.0, %v1450
  %v1459 = vsub.f32 0.0, %v1451
  %v1460 = vmul.f32 %v1458, 1.442695
  %v1461 = vpow.pop %v1460
  %v1462 = vmul.f32 %v1459, 1.442695
  %v1463 = vpow.pop %v1462
  %v1464 = vadd.f32 %v1461, 1.0
  %v1465 = vadd.f32 %v1463, 1.0
  %v1466 = vrcp.pop %v1464
  %v1467 = vmul.f32 %v1464, %v1466
  %v1468 = vsub.f32 1.0, %v1467
  %v1469 = vmul.f32 %v1466, %v1468
  %v1470 = vadd.f32 %v1466, %v1469
  %vm1471 = vweird.f32 %v1464
  %vm1472 = vweird.f32 %v1466
  %vm1473 = vmor %vm1471, %vm1472
  %v1474 = vsel %vm1473, %v1466, %v1470
  %v1475 = vand.u32 2147483647, %v1464
  %vm1476 = vcmp.eq.f32.partialorder %v1475, 8.507059e+37
  %v1477 = vand.u32 %v1464, 2147483648
  %v1478 = vor.u32 1.1754944e-38, %v1477
  %v1479 = vsel %vm1476, %v1478, %v1474
  %v1480 = vmul.f32 1.0, %v1479
  %v1481 = vrcp.pop %v1465
  %v1482 = vmul.f32 %v1465, %v1481
  %v1483 = vsub.f32 1.0, %v1482
  %v1484 = vmul.f32 %v1481, %v1483
  %v1485 = vadd.f32 %v1481, %v1484
  %vm1486 = vweird.f32 %v1465
  %vm1487 = vweird.f32 %v1481
  %vm1488 = vmor %vm1486, %vm1487
  %v1489 = vsel %vm1488, %v1481, %v1485
  %v1490 = vand.u32 2147483647, %v1465
  %vm1491 = vcmp.eq.f32.partialorder %v1490, 8.507059e+37
  %v1492 = vand.u32 %v1465, 2147483648
  %v1493 = vor.u32 1.1754944e-38, %v1492
  %v1494 = vsel %vm1491, %v1493, %v1489
  %v1495 = vmul.f32 1.0, %v1494
  %v1496 = vsub.f32 0.0, %v1452
  %v1497 = vsub.f32 0.0, %v1453
  %v1498 = vmul.f32 %v1496, 1.442695
  %v1499 = vpow.pop %v1498
  %v1500 = vmul.f32 %v1497, 1.442695
  %v1501 = vpow.pop %v1500
  %v1502 = vadd.f32 %v1499, 1.0
  %v1503 = vadd.f32 %v1501, 1.0
  %v1504 = vrcp.pop %v1502
  %v1505 = vmul.f32 %v1502, %v1504
  %v1506 = vsub.f32 1.0, %v1505
  %v1507 = vmul.f32 %v1504, %v1506
  %v1508 = vadd.f32 %v1504, %v1507
  %vm1509 = vweird.f32 %v1502
  %vm1510 = vweird.f32 %v1504
  %vm1511 = vmor %vm1509, %vm1510
  %v1512 = vsel %vm1511, %v1504, %v1508
  %v1513 = vand.u32 2147483647, %v1502
  %vm1514 = vcmp.eq.f32.partialorder %v1513, 8.507059e+37
  %v1515 = vand.u32 %v1502, 2147483648
  %v1516 = vor.u32 1.1754944e-38, %v1515
  %v1517 = vsel %vm1514, %v1516, %v1512
  %v1518 = vmul.f32 1.0, %v1517
  %v1519 = vrcp.pop %v1503
  %v1520 = vmul.f32 %v1503, %v1519
  %v1521 = vsub.f32 1.0, %v1520
  %v1522 = vmul.f32 %v1519, %v1521
  %v1523 = vadd.f32 %v1519, %v1522
  %vm1524 = vweird.f32 %v1503
  %vm1525 = vweird.f32 %v1519
  %vm1526 = vmor %vm1524, %vm1525
  %v1527 = vsel %vm1526, %v1519, %v1523
  %v1528 = vand.u32 2147483647, %v1503
  %vm1529 = vcmp.eq.f32.partialorder %v1528, 8.507059e+37
  %v1530 = vand.u32 %v1503, 2147483648
  %v1531 = vor.u32 1.1754944e-38, %v1530
  %v1532 = vsel %vm1529, %v1531, %v1527
  %v1533 = vmul.f32 1.0, %v1532
  %v1534 = vtanh.pop %v1454
  %v1535 = vtanh.pop %v1455
  %v1536 = vsub.f32 0.0, %v1456
  %v1537 = vsub.f32 0.0, %v1457
  %v1538 = vmul.f32 %v1536, 1.442695
  %v1539 = vpow.pop %v1538
  %v1540 = vmul.f32 %v1537, 1.442695
  %v1541 = vpow.pop %v1540
  %v1542 = vadd.f32 %v1539, 1.0
  %v1543 = vadd.f32 %v1541, 1.0
  %v1544 = vrcp.pop %v1542
  %v1545 = vmul.f32 %v1542, %v1544
  %v1546 = vsub.f32 1.0, %v1545
  %v1547 = vmul.f32 %v1544, %v1546
  %v1548 = vadd.f32 %v1544, %v1547
  %vm1549 = vweird.f32 %v1542
  %vm1550 = vweird.f32 %v1544
  %vm1551 = vmor %vm1549, %vm1550
  %v1552 = vsel %vm1551, %v1544, %v1548
  %v1553 = vand.u32 2147483647, %v1542
  %vm1554 = vcmp.eq.f32.partialorder %v1553, 8.507059e+37
  %v1555 = vand.u32 %v1542, 2147483648
  %v1556 = vor.u32 1.1754944e-38, %v1555
  %v1557 = vsel %vm1554, %v1556, %v1552
  %v1558 = vmul.f32 1.0, %v1557
  %v1559 = vrcp.pop %v1543
  %v1560 = vmul.f32 %v1543, %v1559
  %v1561 = vsub.f32 1.0, %v1560
  %v1562 = vmul.f32 %v1559, %v1561
  %v1563 = vadd.f32 %v1559, %v1562
  %vm1564 = vweird.f32 %v1543
  %vm1565 = vweird.f32 %v1559
  %vm1566 = vmor %vm1564, %vm1565
  %v1567 = vsel %vm1566, %v1559, %v1563
  %v1568 = vand.u32 2147483647, %v1543
  %vm1569 = vcmp.eq.f32.partialorder %v1568, 8.507059e+37
  %v1570 = vand.u32 %v1543, 2147483648
  %v1571 = vor.u32 1.1754944e-38, %v1570
  %v1572 = vsel %vm1569, %v1571, %v1567
  %v1573 = vmul.f32 1.0, %v1572
  %v1574 = vmul.f32 %v1518, %v1385
  %v1575 = vmul.f32 %v1533, %v1386
  %v1576 = vmul.f32 %v1480, %v1534
  %v1577 = vmul.f32 %v1495, %v1535
  %v1578 = vadd.f32 %v1574, %v1576
  %v1579 = vadd.f32 %v1575, %v1577
  %v1580 = vtanh.pop %v1578
  %v1581 = vtanh.pop %v1579
  %v1582 = vmul.f32 %v1558, %v1580
  %v1583 = vmul.f32 %v1573, %v1581
  %v1584 = vmul.f32 %v30, %v1392
  %v1585 = vmul.f32 %v31, %v1392
  %v1586 = vmul.f32 %v32, %v1392
  %v1587 = vmul.f32 %v33, %v1392
  %v1588 = vmul.f32 %v34, %v1392
  %v1589 = vmul.f32 %v35, %v1392
  %v1590 = vadd.f32 %v1584, %v36
  %v1591 = vadd.f32 %v1585, %v37
  %v1592 = vadd.f32 %v1586, %v38
  %v1593 = vadd.f32 %v1587, %v39
  %v1594 = vadd.f32 %v1588, %v40
  %v1595 = vadd.f32 %v1589, %v41
  %v1596 = vsub.f32 0.0, %v1590
  %v1597 = vsub.f32 0.0, %v1591
  %v1598 = vmul.f32 %v1596, 1.442695
  %v1599 = vpow.pop %v1598
  %v1600 = vmul.f32 %v1597, 1.442695
  %v1601 = vpow.pop %v1600
  %v1602 = vadd.f32 %v1599, 1.0
  %v1603 = vadd.f32 %v1601, 1.0
  %v1604 = vrcp.pop %v1602
  %v1605 = vmul.f32 %v1602, %v1604
  %v1606 = vsub.f32 1.0, %v1605
  %v1607 = vmul.f32 %v1604, %v1606
  %v1608 = vadd.f32 %v1604, %v1607
  %vm1609 = vweird.f32 %v1602
  %vm1610 = vweird.f32 %v1604
  %vm1611 = vmor %vm1609, %vm1610
  %v1612 = vsel %vm1611, %v1604, %v1608
  %v1613 = vand.u32 2147483647, %v1602
  %vm1614 = vcmp.eq.f32.partialorder %v1613, 8.507059e+37
  %v1615 = vand.u32 %v1602, 2147483648
  %v1616 = vor.u32 1.1754944e-38, %v1615
  %v1617 = vsel %vm1614, %v1616, %v1612
  %v1618 = vmul.f32 1.0, %v1617
  %v1619 = vrcp.pop %v1603
  %v1620 = vmul.f32 %v1603, %v1619
  %v1621 = vsub.f32 1.0, %v1620
  %v1622 = vmul.f32 %v1619, %v1621
  %v1623 = vadd.f32 %v1619, %v1622
  %vm1624 = vweird.f32 %v1603
  %vm1625 = vweird.f32 %v1619
  %vm1626 = vmor %vm1624, %vm1625
  %v1627 = vsel %vm1626, %v1619, %v1623
  %v1628 = vand.u32 2147483647, %v1603
  %vm1629 = vcmp.eq.f32.partialorder %v1628, 8.507059e+37
  %v1630 = vand.u32 %v1603, 2147483648
  %v1631 = vor.u32 1.1754944e-38, %v1630
  %v1632 = vsel %vm1629, %v1631, %v1627
  %v1633 = vmul.f32 1.0, %v1632
  %v1634 = vtanh.pop %v1592
  %v1635 = vtanh.pop %v1593
  %v1636 = vsub.f32 0.0, %v1594
  %v1637 = vsub.f32 0.0, %v1595
  %v1638 = vmul.f32 %v1636, 1.442695
  %v1639 = vpow.pop %v1638
  %v1640 = vmul.f32 %v1637, 1.442695
  %v1641 = vpow.pop %v1640
  %v1642 = vadd.f32 %v1639, 1.0
  %v1643 = vadd.f32 %v1641, 1.0
  %v1644 = vrcp.pop %v1642
  %v1645 = vmul.f32 %v1642, %v1644
  %v1646 = vsub.f32 1.0, %v1645
  %v1647 = vmul.f32 %v1644, %v1646
  %v1648 = vadd.f32 %v1644, %v1647
  %vm1649 = vweird.f32 %v1642
  %vm1650 = vweird.f32 %v1644
  %vm1651 = vmor %vm1649, %vm1650
  %v1652 = vsel %vm1651, %v1644, %v1648
  %v1653 = vand.u32 2147483647, %v1642
  %vm1654 = vcmp.eq.f32.partialorder %v1653, 8.507059e+37
  %v1655 = vand.u32 %v1642, 2147483648
  %v1656 = vor.u32 1.1754944e-38, %v1655
  %v1657 = vsel %vm1654, %v1656, %v1652
  %v1658 = vmul.f32 1.0, %v1657
  %v1659 = vrcp.pop %v1643
  %v1660 = vmul.f32 %v1643, %v1659
  %v1661 = vsub.f32 1.0, %v1660
  %v1662 = vmul.f32 %v1659, %v1661
  %v1663 = vadd.f32 %v1659, %v1662
  %vm1664 = vweird.f32 %v1643
  %vm1665 = vweird.f32 %v1659
  %vm1666 = vmor %vm1664, %vm1665
  %v1667 = vsel %vm1666, %v1659, %v1663
  %v1668 = vand.u32 2147483647, %v1643
  %vm1669 = vcmp.eq.f32.partialorder %v1668, 8.507059e+37
  %v1670 = vand.u32 %v1643, 2147483648
  %v1671 = vor.u32 1.1754944e-38, %v1670
  %v1672 = vsel %vm1669, %v1671, %v1667
  %v1673 = vmul.f32 1.0, %v1672
  %v1674 = vmul.f32 %v1618, %v1634
  %v1675 = vmul.f32 %v1633, %v1635
  %v1676 = vtanh.pop %v1674
  %v1677 = vtanh.pop %v1675
  %v1678 = vmul.f32 %v1658, %v1676
  %v1679 = vmul.f32 %v1673, %v1677
  %vm1680 = vcmask 261120
  %v1682 = vsel %vm1680, %v60, 0
  %v1685 = vsel %vm1680, %v61, 0
  %1687 = vmatpush.msra.mxu0 0.0
  %1688 = vmatpush.msra.mxu0 0.0
  %1689 = vmatpush.msra.mxu0 0.0
  %1690 = vmatpush.msra.mxu0 0.0
  %1691 = vmatpush.msra.mxu0 0.0
  %1692 = vmatpush.msra.mxu0 0.0
  %1693 = vmatpush.msra.mxu0 0.0
  %1694 = vmatpush.msra.mxu0 0.0
  %1695 = vmatpush.msra.mxu0 0.0
  %1696 = vmatpush.msra.mxu0 0.0
  %1697 = vmatpush.msra.mxu0 0.0
  %1698 = vmatpush.msra.mxu0 0.0
  %1699 = vmatpush.msra.mxu0 %v1679
  %1700 = vmatpush.msra.mxu0 %v1678
  %1701 = vmatpush.msra.mxu0 %v1583
  %1702 = vmatpush.msra.mxu0 %v1582
  %1703 = vmatmul.f32.gmra.mxu0 %v1682
  %v1704 = vpop.f32.mrf.mxu0
  %v1705 = vadd.f32 %v42, %v1704
  %1706 = vmatmul.f32.gmra.mxu0 %v1685
  %v1707 = vpop.f32.mrf.mxu0
  %v1708 = vadd.f32 %v43, %v1707
  %1709 = vdwg.mxu0
  %v1710 = vmax.f32 %v1705, 0.0
  %v1711 = vmax.f32 %v1708, 0.0
  %v1713 = vsel %vm226, %v56, 0
  %v1716 = vsel %vm226, %v57, 0
  %v1719 = vsel %vm226, %v58, 0
  %v1722 = vsel %vm226, %v59, 0
  %1724 = vmatpush.msra.mxu0 0.0
  %1725 = vmatpush.msra.mxu0 0.0
  %1726 = vmatpush.msra.mxu0 0.0
  %1727 = vmatpush.msra.mxu0 0.0
  %1728 = vmatpush.msra.mxu0 0.0
  %1729 = vmatpush.msra.mxu0 0.0
  %1730 = vmatpush.msra.mxu0 0.0
  %1731 = vmatpush.msra.mxu0 0.0
  %1732 = vmatpush.msra.mxu0 0.0
  %1733 = vmatpush.msra.mxu0 0.0
  %1734 = vmatpush.msra.mxu0 0.0
  %1735 = vmatpush.msra.mxu0 0.0
  %1736 = vmatpush.msra.mxu0 0.0
  %1737 = vmatpush.msra.mxu0 0.0
  %1738 = vmatpush.msra.mxu0 %v1711
  %1739 = vmatpush.msra.mxu0 %v1710
  %1740 = vmatmul.f32.gmra.mxu0 %v1713
  %v1741 = vpop.f32.mrf.mxu0
  %v1742 = vadd.f32 %v44, %v1741
  %1743 = vmatmul.f32.gmra.mxu0 %v1716
  %v1744 = vpop.f32.mrf.mxu0
  %v1745 = vadd.f32 %v45, %v1744
  %1746 = vmatmul.f32.gmra.mxu0 %v1719
  %v1747 = vpop.f32.mrf.mxu0
  %v1748 = vadd.f32 %v46, %v1747
  %1749 = vmatmul.f32.gmra.mxu0 %v1722
  %v1750 = vpop.f32.mrf.mxu0
  %v1751 = vadd.f32 %v47, %v1750
  %1752 = vdwg.mxu0
  %v1753 = vmul.f32 %v1748, 0.5
  %v1754 = vmul.f32 %v1751, 0.5
  %v1755 = vmul.f32 %v1753, 1.442695
  %v1756 = vpow.pop %v1755
  %v1757 = vmul.f32 %v1754, 1.442695
  %v1758 = vpow.pop %v1757
  %v1759 = vmul.f32 %v62, %v1756
  %v1760 = vmul.f32 %v63, %v1758
  %v1761 = vadd.f32 %v1759, %v1742
  %v1762 = vadd.f32 %v1760, %v1745
  %1763 = vst [vmem:[%s3] sm:$0xff] %v1761
  %1764 = vst [vmem:[%s3 + $0x8] sm:$0xff] %v1762
  %1765 = vst [vmem:[%s3 + $0x10] sm:$0xff] %v1742
  %1766 = vst [vmem:[%s3 + $0x18] sm:$0xff] %v1745
  %1767 = vst [vmem:[%s3 + $0x20] sm:$0xff] %v1748
  %1768 = vst [vmem:[%s3 + $0x28] sm:$0xff] %v1751
  // Predicated region
  $region14: #{encoder_forward.1} parent=0 // pred_check
    _
  $region15: #{encoder_forward.1} parent=0 // pred_check_branch
    %1770 = sbr.rel (0) target = $region17
  $region16: #{encoder_forward.1} parent=0 // pred_region
    _
  $region17: #{encoder_forward.1} parent=0 // pred_fallthru
    _
  // Predicated region
  $region18: #{encoder_forward.1} parent=0 // pred_check
    _
  $region19: #{encoder_forward.1} parent=0 // pred_check_branch
    %1772 = sbr.rel (0) target = $region21
  $region20: #{encoder_forward.1} parent=0 // pred_region
    _
  $region21: #{encoder_forward.1} parent=0 // pred_fallthru
    _

</llo_original>
